<compile_context>
chip_gen: v7x
topology: tpu7x:2x2x1
jax: 0.10.0
libtpu: 0.0.40
codegen_flags: <defaults>
</compile_context>

<pallas_src>
import numpy as np
import jax
import jax.numpy as jnp
from jax import lax
from jax.experimental import pallas as pl
from jax.experimental.pallas import tpu as pltpu

LANE = 128


def _round_up(x, m):
    return ((x + m - 1) // m) * m


def unet_conv_kernel(x_ref, m1_ref, b1_ref, m2_ref, b2_ref,
                     r_ref, rt_ref, ws1_ref, bs1_ref, ws2_ref, bs2_ref,
                     o_ref):
    nb, H, in_lanes = x_ref.shape
    H2 = H - 4
    l2 = m2_ref.shape[2]
    mm_dtype = m1_ref.dtype            # bf16 (or f32 fallback) for MXU operands

    def shift_up(v, k):
        # rows shifted up by k, zero-filled at the bottom (only invalid rows
        # per image ever see the fill / cross-image bleed).
        if k == 0:
            return v
        zpad = jnp.zeros((k,) + v.shape[1:], v.dtype)
        return jnp.concatenate([v[k:], zpad], axis=0)

    def conv3x3(lhs, m_ref, bias):
        # lhs: (nb*H, K) stacked images; m_ref: (3, K, Lout) per-tap band blocks.
        # 3 accumulating K=128 dots; band blocks are read from VMEM at the dot
        # site (not hoisted) to keep vreg pressure down.
        acc = jnp.dot(lhs, m_ref[0], preferred_element_type=jnp.float32)
        for kh in (1, 2):
            acc += jnp.dot(shift_up(lhs, kh), m_ref[kh],
                           preferred_element_type=jnp.float32)
        z = acc + bias                                   # f32
        return jnp.where(z >= 0, z, 0.1 * z)             # LeakyReLU(0.1), f32

    # ---- stack all nb images along the M axis (free: H % 8 == 0, lanes = 128) ----
    xf = x_ref[...].reshape(nb * H, in_lanes)            # bf16 slab
    z1 = conv3x3(xf, m1_ref, b1_ref[...])                # (nb*H, l1); rows >= H-2 per image garbage
    z2 = conv3x3(z1.astype(mm_dtype), m2_ref, b2_ref[...])   # (nb*H, l2); rows >= H-4 per image garbage

    z2 = z2.reshape(nb, H, l2)[:, :H2, :]                # (nb, H2, l2) valid rows only

    # ---- SEBlock, batched over the nb images (f32) ----
    colsum = jnp.sum(z2, axis=1)                                          # (nb, l2)
    mean = jnp.dot(colsum, r_ref[...],
                   preferred_element_type=jnp.float32)                    # (nb, Cpad); 1/(H2*W2) folded into R
    s1 = jnp.maximum(jnp.dot(mean, ws1_ref[...],
                             preferred_element_type=jnp.float32) + bs1_ref[...], 0.0)
    s2 = jnp.dot(s1, ws2_ref[...],
                 preferred_element_type=jnp.float32) + bs2_ref[...]
    gate = pl.reciprocal(1.0 + jnp.exp(-s2), approx=True)                 # sigmoid via EUP recip
    gate_l = jnp.dot(gate, rt_ref[...],
                     preferred_element_type=jnp.float32)                  # (nb, l2)

    o_ref[...] = (z2 * gate_l[:, None, :]).astype(o_ref.dtype)            # lane-dense store


def _band_matrix(w_oihw, w_in, row_lanes, out_lanes):
    """Tap-split banded weights for a 3x3 VALID conv in the (H, W*C)-slab layout.

    w_oihw: (Cout, Cin, 3, 3) PyTorch-layout weights (may be traced arrays).
    Returns f32 (3, row_lanes, out_lanes): one block per kh tap; within a block,
    row index = wi*Cin+ci (zero-padded to row_lanes), column index = wo*Cout+co
    (zero-padded to out_lanes).
    """
    cout, cin, _, _ = w_oihw.shape
    w_out = w_in - 2
    wt = jnp.transpose(w_oihw.astype(jnp.float32), (2, 3, 1, 0))    # (kh, kw, ci, co)
    sel = np.zeros((3, w_in, w_out), np.float32)                    # static selector
    for k in range(3):
        for v in range(w_out):
            sel[k, v + k, v] = 1.0
    band = jnp.einsum('hkio,kwv->hwivo', wt, jnp.asarray(sel))      # (3, w_in, ci, w_out, co)
    band = band.reshape(3, w_in * cin, w_out * cout)
    band = jnp.pad(band, ((0, 0),
                          (0, row_lanes - w_in * cin),
                          (0, out_lanes - w_out * cout)))
    return band                                                      # (3, row_lanes, out_lanes)


def unet_conv_pallas(x_nchw, params, *, images_per_block=32, use_bf16=True):
    w1, b1, w2, b2, sw1, sb1, sw2, sb2 = params
    N, Cin, H, W = x_nchw.shape
    Cm = w1.shape[0]
    Cout = w2.shape[0]
    Cse = sw1.shape[0]
    W1, W2 = W - 2, W - 4
    H2 = H - 4

    in_lanes = _round_up(W * Cin, LANE)    # lane-dense input slab
    l1 = _round_up(W1 * Cm, LANE)          # conv1 output lanes
    l2 = _round_up(W2 * Cout, LANE)        # conv2 / output lanes
    c_pad = _round_up(max(Cout, Cse), LANE)
    mm_dtype = jnp.bfloat16 if use_bf16 else jnp.float32

    # images per grid step: fat steps amortize the ~0.35us/step overhead, but
    # keep >= 2 steps so the "parallel" batch axis can shard across v7x's 2 TCs.
    nb = max(1, min(images_per_block, N))
    if N >= 2:
        nb = min(nb, pl.cdiv(N, 2))
    n_pad = _round_up(N, nb)

    # ---- glue: layout + banded-weight construction (traceable jnp ops) ----
    # bf16 slab halves HBM->VMEM input traffic (operands are cast before the MXU anyway).
    x2d = jnp.transpose(x_nchw.astype(mm_dtype), (0, 2, 3, 1)).reshape(N, H, W * Cin)
    x2d = jnp.pad(x2d, ((0, n_pad - N), (0, 0), (0, in_lanes - W * Cin)))
    # TODO(synk): accept NHWC / pre-flattened padded slabs between layers so this
    # transpose+pad (and the inverse below) stops costing extra HBM round trips.

    M1 = _band_matrix(w1, W, in_lanes, l1).astype(mm_dtype)         # (3, in_lanes, l1)
    M2 = _band_matrix(w2, W1, l1, l2).astype(mm_dtype)              # (3, l1, l2)
    b1t = jnp.pad(jnp.tile(b1.astype(jnp.float32), W1), (0, l1 - W1 * Cm)).reshape(1, l1)
    b2t = jnp.pad(jnp.tile(b2.astype(jnp.float32), W2), (0, l2 - W2 * Cout)).reshape(1, l2)

    # Channel gather/scatter for SE global mean and gate broadcast (shape-only
    # constants, channel dims padded to 128 lanes; pad rows/cols are zero).
    R = np.zeros((l2, c_pad), np.float32)
    RT = np.zeros((c_pad, l2), np.float32)
    eye = np.eye(Cout, dtype=np.float32)
    for w in range(W2):
        R[w * Cout:(w + 1) * Cout, :Cout] = eye / float(H2 * W2)    # fold mean scale in
        RT[:Cout, w * Cout:(w + 1) * Cout] = eye
    R = jnp.asarray(R)
    RT = jnp.asarray(RT)

    ws1 = jnp.zeros((c_pad, c_pad), jnp.float32).at[:Cout, :Cse].set(
        jnp.reshape(sw1.astype(jnp.float32), (Cse, Cout)).T)
    bs1 = jnp.zeros((1, c_pad), jnp.float32).at[0, :Cse].set(sb1.astype(jnp.float32))
    ws2 = jnp.zeros((c_pad, c_pad), jnp.float32).at[:Cse, :Cout].set(
        jnp.reshape(sw2.astype(jnp.float32), (Cout, Cse)).T)
    bs2 = jnp.zeros((1, c_pad), jnp.float32).at[0, :Cout].set(sb2.astype(jnp.float32))

    # TODO(synk): for non-toy W, tile the width axis with a 2-pixel halo (band
    # matrices stay near-dense), single-buffer the constant band/SE matrices, and
    # size tiles per chip (v7x 64 MiB VMEM vs 128 MiB on v5e/v6e) via get_tpu_info.
    out2d = pl.pallas_call(
        unet_conv_kernel,
        out_shape=jax.ShapeDtypeStruct((n_pad, H2, l2), jnp.float32),
        grid_spec=pltpu.PrefetchScalarGridSpec(
            num_scalar_prefetch=0,
            grid=(n_pad // nb,),
            in_specs=[
                pl.BlockSpec((nb, H, in_lanes), lambda n: (n, 0, 0)),
                pl.BlockSpec((3, in_lanes, l1), lambda n: (0, 0, 0)),
                pl.BlockSpec((1, l1), lambda n: (0, 0)),
                pl.BlockSpec((3, l1, l2), lambda n: (0, 0, 0)),
                pl.BlockSpec((1, l2), lambda n: (0, 0)),
                pl.BlockSpec((l2, c_pad), lambda n: (0, 0)),
                pl.BlockSpec((c_pad, l2), lambda n: (0, 0)),
                pl.BlockSpec((c_pad, c_pad), lambda n: (0, 0)),
                pl.BlockSpec((1, c_pad), lambda n: (0, 0)),
                pl.BlockSpec((c_pad, c_pad), lambda n: (0, 0)),
                pl.BlockSpec((1, c_pad), lambda n: (0, 0)),
            ],
            out_specs=pl.BlockSpec((nb, H2, l2), lambda n: (n, 0, 0)),
        ),
        compiler_params=pltpu.CompilerParams(
            dimension_semantics=("parallel",),        # batch axis -> megacore sharding
            vmem_limit_bytes=48 * 1024 * 1024,        # fits v7x's 64 MiB with headroom
        ),
    )(x2d, M1, b1t, M2, b2t, R, RT, ws1, bs1, ws2, bs2)

    out = out2d[:N, :, :W2 * Cout].reshape(N, H2, W2, Cout)
    return jnp.transpose(out, (0, 3, 1, 2))            # back to NCHW


def unet_conv_ref(x, params):
    """Pure-JAX f32 reference matching the PyTorch forward (NCHW)."""
    w1, b1, w2, b2, sw1, sb1, sw2, sb2 = params
    dn = ('NCHW', 'OIHW', 'NCHW')
    lrelu = lambda t: jnp.where(t >= 0, t, 0.1 * t)
    z = lax.conv_general_dilated(x, w1, (1, 1), 'VALID', dimension_numbers=dn)
    z = lrelu(z + b1[None, :, None, None])
    z = lax.conv_general_dilated(z, w2, (1, 1), 'VALID', dimension_numbers=dn)
    z = lrelu(z + b2[None, :, None, None])
    x0 = jnp.mean(z, axis=(2, 3), keepdims=True)
    x0 = lax.conv_general_dilated(x0, sw1, (1, 1), 'VALID', dimension_numbers=dn)
    x0 = jnp.maximum(x0 + sb1[None, :, None, None], 0.0)
    x0 = lax.conv_general_dilated(x0, sw2, (1, 1), 'VALID', dimension_numbers=dn)
    x0 = jax.nn.sigmoid(x0 + sb2[None, :, None, None])
    return z * x0


if __name__ == "__main__":
    key = jax.random.PRNGKey(0)
    N, Cin, Cm, Cout, H, W = 2, 4, 8, 8, 16, 16
    Cse = Cout // 8   # SE reduction = 8

    ks = jax.random.split(key, 9)
    x = jax.random.normal(ks[0], (N, Cin, H, W), jnp.float32)
    # deterministic synthetic parameters (PyTorch shape conventions)
    w1 = jax.random.normal(ks[1], (Cm, Cin, 3, 3), jnp.float32) * 0.1
    b1 = jax.random.normal(ks[2], (Cm,), jnp.float32) * 0.1
    w2 = jax.random.normal(ks[3], (Cout, Cm, 3, 3), jnp.float32) * 0.1
    b2 = jax.random.normal(ks[4], (Cout,), jnp.float32) * 0.1
    sw1 = jax.random.normal(ks[5], (Cse, Cout, 1, 1), jnp.float32) * 0.1
    sb1 = jax.random.normal(ks[6], (Cse,), jnp.float32) * 0.1
    sw2 = jax.random.normal(ks[7], (Cout, Cse, 1, 1), jnp.float32) * 0.1
    sb2 = jax.random.normal(ks[8], (Cout,), jnp.float32) * 0.1
    params = (w1, b1, w2, b2, sw1, sb1, sw2, sb2)

    out = unet_conv_pallas(x, params)
    out = jax.block_until_ready(out)

    ref = unet_conv_ref(x, params)
    # bf16 MXU operands (f32 accumulation) => looser tolerance than a pure-f32 run.
    np.testing.assert_allclose(np.asarray(out), np.asarray(ref), rtol=2e-2, atol=2e-2)
    print("KERNEL_OK")
</pallas_src>

<mosaic_0001>
module attributes {stable_mosaic.version = 11 : i64} {
  func.func @unet_conv_kernel(%arg0: i32, %arg1: memref<1x16x128xbf16, #tpu.memory_space<vmem>>, %arg2: memref<3x128x128xbf16, #tpu.memory_space<vmem>>, %arg3: memref<1x128xf32, #tpu.memory_space<vmem>>, %arg4: memref<3x128x128xbf16, #tpu.memory_space<vmem>>, %arg5: memref<1x128xf32, #tpu.memory_space<vmem>>, %arg6: memref<128x128xf32, #tpu.memory_space<vmem>>, %arg7: memref<128x128xf32, #tpu.memory_space<vmem>>, %arg8: memref<128x128xf32, #tpu.memory_space<vmem>>, %arg9: memref<1x128xf32, #tpu.memory_space<vmem>>, %arg10: memref<128x128xf32, #tpu.memory_space<vmem>>, %arg11: memref<1x128xf32, #tpu.memory_space<vmem>>, %arg12: memref<1x12x128xf32, #tpu.memory_space<vmem>>) attributes {dimension_semantics = [#tpu.dimension_semantics<parallel>], iteration_bounds = array<i64: 2>, scalar_prefetch = 0 : i64, scratch_operands = 0 : i64, tpu.core_type = #tpu.core_type<tc>, window_params = [{transform_indices = @transform_0, window_bounds = array<i64: 1, 16, 128>}, {pipeline_mode = #tpu.pipeline_mode<synchronous>, transform_indices = @transform_1, window_bounds = array<i64: 3, 128, 128>}, {pipeline_mode = #tpu.pipeline_mode<synchronous>, transform_indices = @transform_2, window_bounds = array<i64: 1, 128>}, {pipeline_mode = #tpu.pipeline_mode<synchronous>, transform_indices = @transform_3, window_bounds = array<i64: 3, 128, 128>}, {pipeline_mode = #tpu.pipeline_mode<synchronous>, transform_indices = @transform_4, window_bounds = array<i64: 1, 128>}, {pipeline_mode = #tpu.pipeline_mode<synchronous>, transform_indices = @transform_5, window_bounds = array<i64: 128, 128>}, {pipeline_mode = #tpu.pipeline_mode<synchronous>, transform_indices = @transform_6, window_bounds = array<i64: 128, 128>}, {pipeline_mode = #tpu.pipeline_mode<synchronous>, transform_indices = @transform_7, window_bounds = array<i64: 128, 128>}, {pipeline_mode = #tpu.pipeline_mode<synchronous>, transform_indices = @transform_8, window_bounds = array<i64: 1, 128>}, {pipeline_mode = #tpu.pipeline_mode<synchronous>, transform_indices = @transform_9, window_bounds = array<i64: 128, 128>}, {pipeline_mode = #tpu.pipeline_mode<synchronous>, transform_indices = @transform_10, window_bounds = array<i64: 1, 128>}, {transform_indices = @transform_11, window_bounds = array<i64: 1, 12, 128>}]} {
    %c0 = arith.constant 0 : index
    %c0_0 = arith.constant 0 : index
    %c0_1 = arith.constant 0 : index
    %0 = vector.load %arg1[%c0, %c0_0, %c0_1] : memref<1x16x128xbf16, #tpu.memory_space<vmem>>, vector<1x16x128xbf16>
    %1 = vector.shape_cast %0 : vector<1x16x128xbf16> to vector<16x128xbf16>
    %c0_2 = arith.constant 0 : index
    %c0_3 = arith.constant 0 : index
    %2 = vector.load %arg3[%c0_2, %c0_3] : memref<1x128xf32, #tpu.memory_space<vmem>>, vector<1x128xf32>
    %c0_4 = arith.constant 0 : index
    %c0_5 = arith.constant 0 : index
    %c0_6 = arith.constant 0 : index
    %3 = vector.load %arg2[%c0_4, %c0_5, %c0_6] : memref<3x128x128xbf16, #tpu.memory_space<vmem>>, vector<1x128x128xbf16>
    %4 = vector.shape_cast %3 : vector<1x128x128xbf16> to vector<128x128xbf16>
    %cst = arith.constant dense<0.000000e+00> : vector<16x128xf32>
    %5 = tpu.matmul %1, %4, %cst {dimension_numbers = #tpu.dot_dimension_numbers<[1], [0], [0], [1], [0, 0, 1, 1], [], []>} : vector<16x128xbf16>, vector<128x128xbf16>, vector<16x128xf32> -> vector<16x128xf32>
    %cst_7 = arith.constant 0.000000e+00 : bf16
    %6 = vector.broadcast %cst_7 : bf16 to vector<1x128xbf16>
    %7 = vector.extract_strided_slice %1 {offsets = [1, 0], sizes = [15, 128], strides = [1, 1]} : vector<16x128xbf16> to vector<15x128xbf16>
    %8 = tpu.concatenate %7, %6 in 0 : vector<15x128xbf16>, vector<1x128xbf16> -> vector<16x128xbf16>
    %c1 = arith.constant 1 : index
    %c0_8 = arith.constant 0 : index
    %c0_9 = arith.constant 0 : index
    %9 = vector.load %arg2[%c1, %c0_8, %c0_9] : memref<3x128x128xbf16, #tpu.memory_space<vmem>>, vector<1x128x128xbf16>
    %10 = vector.shape_cast %9 : vector<1x128x128xbf16> to vector<128x128xbf16>
    %cst_10 = arith.constant dense<0.000000e+00> : vector<16x128xf32>
    %11 = tpu.matmul %8, %10, %cst_10 {dimension_numbers = #tpu.dot_dimension_numbers<[1], [0], [0], [1], [0, 0, 1, 1], [], []>} : vector<16x128xbf16>, vector<128x128xbf16>, vector<16x128xf32> -> vector<16x128xf32>
    %12 = arith.addf %5, %11 : vector<16x128xf32>
    %cst_11 = arith.constant 0.000000e+00 : bf16
    %13 = vector.broadcast %cst_11 : bf16 to vector<2x128xbf16>
    %14 = vector.extract_strided_slice %1 {offsets = [2, 0], sizes = [14, 128], strides = [1, 1]} : vector<16x128xbf16> to vector<14x128xbf16>
    %15 = tpu.concatenate %14, %13 in 0 : vector<14x128xbf16>, vector<2x128xbf16> -> vector<16x128xbf16>
    %c2 = arith.constant 2 : index
    %c0_12 = arith.constant 0 : index
    %c0_13 = arith.constant 0 : index
    %16 = vector.load %arg2[%c2, %c0_12, %c0_13] : memref<3x128x128xbf16, #tpu.memory_space<vmem>>, vector<1x128x128xbf16>
    %17 = vector.shape_cast %16 : vector<1x128x128xbf16> to vector<128x128xbf16>
    %cst_14 = arith.constant dense<0.000000e+00> : vector<16x128xf32>
    %18 = tpu.matmul %15, %17, %cst_14 {dimension_numbers = #tpu.dot_dimension_numbers<[1], [0], [0], [1], [0, 0, 1, 1], [], []>} : vector<16x128xbf16>, vector<128x128xbf16>, vector<16x128xf32> -> vector<16x128xf32>
    %19 = arith.addf %12, %18 : vector<16x128xf32>
    %20 = vector.broadcast %2 : vector<1x128xf32> to vector<16x128xf32>
    %21 = arith.addf %19, %20 : vector<16x128xf32>
    %cst_15 = arith.constant 0.000000e+00 : f32
    %22 = vector.broadcast %cst_15 : f32 to vector<16x128xf32>
    %23 = arith.cmpf oge, %21, %22 : vector<16x128xf32>
    %cst_16 = arith.constant 1.000000e-01 : f32
    %24 = vector.broadcast %cst_16 : f32 to vector<16x128xf32>
    %25 = arith.mulf %24, %21 : vector<16x128xf32>
    %26 = arith.select %23, %21, %25 : vector<16x128xi1>, vector<16x128xf32>
    %27 = arith.truncf %26 : vector<16x128xf32> to vector<16x128xbf16>
    %c0_17 = arith.constant 0 : index
    %c0_18 = arith.constant 0 : index
    %28 = vector.load %arg5[%c0_17, %c0_18] : memref<1x128xf32, #tpu.memory_space<vmem>>, vector<1x128xf32>
    %c0_19 = arith.constant 0 : index
    %c0_20 = arith.constant 0 : index
    %c0_21 = arith.constant 0 : index
    %29 = vector.load %arg4[%c0_19, %c0_20, %c0_21] : memref<3x128x128xbf16, #tpu.memory_space<vmem>>, vector<1x128x128xbf16>
    %30 = vector.shape_cast %29 : vector<1x128x128xbf16> to vector<128x128xbf16>
    %cst_22 = arith.constant dense<0.000000e+00> : vector<16x128xf32>
    %31 = tpu.matmul %27, %30, %cst_22 {dimension_numbers = #tpu.dot_dimension_numbers<[1], [0], [0], [1], [0, 0, 1, 1], [], []>} : vector<16x128xbf16>, vector<128x128xbf16>, vector<16x128xf32> -> vector<16x128xf32>
    %cst_23 = arith.constant 0.000000e+00 : bf16
    %32 = vector.broadcast %cst_23 : bf16 to vector<1x128xbf16>
    %33 = vector.extract_strided_slice %27 {offsets = [1, 0], sizes = [15, 128], strides = [1, 1]} : vector<16x128xbf16> to vector<15x128xbf16>
    %34 = tpu.concatenate %33, %32 in 0 : vector<15x128xbf16>, vector<1x128xbf16> -> vector<16x128xbf16>
    %c1_24 = arith.constant 1 : index
    %c0_25 = arith.constant 0 : index
    %c0_26 = arith.constant 0 : index
    %35 = vector.load %arg4[%c1_24, %c0_25, %c0_26] : memref<3x128x128xbf16, #tpu.memory_space<vmem>>, vector<1x128x128xbf16>
    %36 = vector.shape_cast %35 : vector<1x128x128xbf16> to vector<128x128xbf16>
    %cst_27 = arith.constant dense<0.000000e+00> : vector<16x128xf32>
    %37 = tpu.matmul %34, %36, %cst_27 {dimension_numbers = #tpu.dot_dimension_numbers<[1], [0], [0], [1], [0, 0, 1, 1], [], []>} : vector<16x128xbf16>, vector<128x128xbf16>, vector<16x128xf32> -> vector<16x128xf32>
    %38 = arith.addf %31, %37 : vector<16x128xf32>
    %cst_28 = arith.constant 0.000000e+00 : bf16
    %39 = vector.broadcast %cst_28 : bf16 to vector<2x128xbf16>
    %40 = vector.extract_strided_slice %27 {offsets = [2, 0], sizes = [14, 128], strides = [1, 1]} : vector<16x128xbf16> to vector<14x128xbf16>
    %41 = tpu.concatenate %40, %39 in 0 : vector<14x128xbf16>, vector<2x128xbf16> -> vector<16x128xbf16>
    %c2_29 = arith.constant 2 : index
    %c0_30 = arith.constant 0 : index
    %c0_31 = arith.constant 0 : index
    %42 = vector.load %arg4[%c2_29, %c0_30, %c0_31] : memref<3x128x128xbf16, #tpu.memory_space<vmem>>, vector<1x128x128xbf16>
    %43 = vector.shape_cast %42 : vector<1x128x128xbf16> to vector<128x128xbf16>
    %cst_32 = arith.constant dense<0.000000e+00> : vector<16x128xf32>
    %44 = tpu.matmul %41, %43, %cst_32 {dimension_numbers = #tpu.dot_dimension_numbers<[1], [0], [0], [1], [0, 0, 1, 1], [], []>} : vector<16x128xbf16>, vector<128x128xbf16>, vector<16x128xf32> -> vector<16x128xf32>
    %45 = arith.addf %38, %44 : vector<16x128xf32>
    %46 = vector.broadcast %28 : vector<1x128xf32> to vector<16x128xf32>
    %47 = arith.addf %45, %46 : vector<16x128xf32>
    %cst_33 = arith.constant 0.000000e+00 : f32
    %48 = vector.broadcast %cst_33 : f32 to vector<16x128xf32>
    %49 = arith.cmpf oge, %47, %48 : vector<16x128xf32>
    %cst_34 = arith.constant 1.000000e-01 : f32
    %50 = vector.broadcast %cst_34 : f32 to vector<16x128xf32>
    %51 = arith.mulf %50, %47 : vector<16x128xf32>
    %52 = arith.select %49, %47, %51 : vector<16x128xi1>, vector<16x128xf32>
    %53 = vector.shape_cast %52 : vector<16x128xf32> to vector<1x16x128xf32>
    %54 = vector.extract_strided_slice %53 {offsets = [0, 0, 0], sizes = [1, 12, 128], strides = [1, 1, 1]} : vector<1x16x128xf32> to vector<1x12x128xf32>
    %cst_35 = arith.constant dense<0.000000e+00> : vector<1x128xf32>
    %55 = vector.multi_reduction <add>, %54, %cst_35 [1] : vector<1x12x128xf32> to vector<1x128xf32>
    %c0_36 = arith.constant 0 : index
    %c0_37 = arith.constant 0 : index
    %56 = vector.load %arg6[%c0_36, %c0_37] : memref<128x128xf32, #tpu.memory_space<vmem>>, vector<128x128xf32>
    %cst_38 = arith.constant dense<0.000000e+00> : vector<1x128xf32>
    %57 = tpu.matmul %55, %56, %cst_38 {dimension_numbers = #tpu.dot_dimension_numbers<[1], [0], [0], [1], [0, 0, 1, 1], [], []>} : vector<1x128xf32>, vector<128x128xf32>, vector<1x128xf32> -> vector<1x128xf32>
    %c0_39 = arith.constant 0 : index
    %c0_40 = arith.constant 0 : index
    %58 = vector.load %arg8[%c0_39, %c0_40] : memref<128x128xf32, #tpu.memory_space<vmem>>, vector<128x128xf32>
    %cst_41 = arith.constant dense<0.000000e+00> : vector<1x128xf32>
    %59 = tpu.matmul %57, %58, %cst_41 {dimension_numbers = #tpu.dot_dimension_numbers<[1], [0], [0], [1], [0, 0, 1, 1], [], []>} : vector<1x128xf32>, vector<128x128xf32>, vector<1x128xf32> -> vector<1x128xf32>
    %c0_42 = arith.constant 0 : index
    %c0_43 = arith.constant 0 : index
    %60 = vector.load %arg9[%c0_42, %c0_43] : memref<1x128xf32, #tpu.memory_space<vmem>>, vector<1x128xf32>
    %61 = arith.addf %59, %60 : vector<1x128xf32>
    %cst_44 = arith.constant 0.000000e+00 : f32
    %62 = vector.broadcast %cst_44 : f32 to vector<1x128xf32>
    %63 = arith.maximumf %61, %62 : vector<1x128xf32>
    %c0_45 = arith.constant 0 : index
    %c0_46 = arith.constant 0 : index
    %64 = vector.load %arg10[%c0_45, %c0_46] : memref<128x128xf32, #tpu.memory_space<vmem>>, vector<128x128xf32>
    %cst_47 = arith.constant dense<0.000000e+00> : vector<1x128xf32>
    %65 = tpu.matmul %63, %64, %cst_47 {dimension_numbers = #tpu.dot_dimension_numbers<[1], [0], [0], [1], [0, 0, 1, 1], [], []>} : vector<1x128xf32>, vector<128x128xf32>, vector<1x128xf32> -> vector<1x128xf32>
    %c0_48 = arith.constant 0 : index
    %c0_49 = arith.constant 0 : index
    %66 = vector.load %arg11[%c0_48, %c0_49] : memref<1x128xf32, #tpu.memory_space<vmem>>, vector<1x128xf32>
    %67 = arith.addf %65, %66 : vector<1x128xf32>
    %cst_50 = arith.constant 0.000000e+00 : f32
    %68 = vector.broadcast %cst_50 : f32 to vector<1x128xf32>
    %69 = arith.subf %68, %67 : vector<1x128xf32>
    %70 = math.exp %69 : vector<1x128xf32>
    %cst_51 = arith.constant 1.000000e+00 : f32
    %71 = vector.broadcast %cst_51 : f32 to vector<1x128xf32>
    %72 = arith.addf %71, %70 : vector<1x128xf32>
    %73 = tpu.reciprocal %72 {approx = true} : vector<1x128xf32> -> vector<1x128xf32>
    %c0_52 = arith.constant 0 : index
    %c0_53 = arith.constant 0 : index
    %74 = vector.load %arg7[%c0_52, %c0_53] : memref<128x128xf32, #tpu.memory_space<vmem>>, vector<128x128xf32>
    %cst_54 = arith.constant dense<0.000000e+00> : vector<1x128xf32>
    %75 = tpu.matmul %73, %74, %cst_54 {dimension_numbers = #tpu.dot_dimension_numbers<[1], [0], [0], [1], [0, 0, 1, 1], [], []>} : vector<1x128xf32>, vector<128x128xf32>, vector<1x128xf32> -> vector<1x128xf32>
    %76 = vector.shape_cast %75 : vector<1x128xf32> to vector<1x1x128xf32>
    %77 = vector.broadcast %76 : vector<1x1x128xf32> to vector<1x12x128xf32>
    %78 = arith.mulf %54, %77 : vector<1x12x128xf32>
    %c0_55 = arith.constant 0 : index
    %c0_56 = arith.constant 0 : index
    %c0_57 = arith.constant 0 : index
    %79 = vector.load %arg12[%c0_55, %c0_56, %c0_57] : memref<1x12x128xf32, #tpu.memory_space<vmem>>, vector<1x12x128xf32>
    tpu.vector_store %arg12[%c0_55, %c0_56, %c0_57], %78 {strides = array<i32>} : memref<1x12x128xf32, #tpu.memory_space<vmem>>, vector<1x12x128xf32>,
    return
  }
  func.func @transform_0(%arg0: i32) -> (i32, i32, i32) {
    %c0_i32 = arith.constant 0 : i32
    %c0_i32_0 = arith.constant 0 : i32
    %c0_i32_1 = arith.constant 0 : i32
    return %arg0, %c0_i32, %c0_i32_0 : i32, i32, i32
  }
  func.func @transform_1(%arg0: i32) -> (i32, i32, i32) {
    %c0_i32 = arith.constant 0 : i32
    %c0_i32_0 = arith.constant 0 : i32
    %c0_i32_1 = arith.constant 0 : i32
    %c0_i32_2 = arith.constant 0 : i32
    return %c0_i32, %c0_i32_0, %c0_i32_1 : i32, i32, i32
  }
  func.func @transform_2(%arg0: i32) -> (i32, i32) {
    %c0_i32 = arith.constant 0 : i32
    %c0_i32_0 = arith.constant 0 : i32
    %c0_i32_1 = arith.constant 0 : i32
    return %c0_i32, %c0_i32_0 : i32, i32
  }
  func.func @transform_3(%arg0: i32) -> (i32, i32, i32) {
    %c0_i32 = arith.constant 0 : i32
    %c0_i32_0 = arith.constant 0 : i32
    %c0_i32_1 = arith.constant 0 : i32
    %c0_i32_2 = arith.constant 0 : i32
    return %c0_i32, %c0_i32_0, %c0_i32_1 : i32, i32, i32
  }
  func.func @transform_4(%arg0: i32) -> (i32, i32) {
    %c0_i32 = arith.constant 0 : i32
    %c0_i32_0 = arith.constant 0 : i32
    %c0_i32_1 = arith.constant 0 : i32
    return %c0_i32, %c0_i32_0 : i32, i32
  }
  func.func @transform_5(%arg0: i32) -> (i32, i32) {
    %c0_i32 = arith.constant 0 : i32
    %c0_i32_0 = arith.constant 0 : i32
    %c0_i32_1 = arith.constant 0 : i32
    return %c0_i32, %c0_i32_0 : i32, i32
  }
  func.func @transform_6(%arg0: i32) -> (i32, i32) {
    %c0_i32 = arith.constant 0 : i32
    %c0_i32_0 = arith.constant 0 : i32
    %c0_i32_1 = arith.constant 0 : i32
    return %c0_i32, %c0_i32_0 : i32, i32
  }
  func.func @transform_7(%arg0: i32) -> (i32, i32) {
    %c0_i32 = arith.constant 0 : i32
    %c0_i32_0 = arith.constant 0 : i32
    %c0_i32_1 = arith.constant 0 : i32
    return %c0_i32, %c0_i32_0 : i32, i32
  }
  func.func @transform_8(%arg0: i32) -> (i32, i32) {
    %c0_i32 = arith.constant 0 : i32
    %c0_i32_0 = arith.constant 0 : i32
    %c0_i32_1 = arith.constant 0 : i32
    return %c0_i32, %c0_i32_0 : i32, i32
  }
  func.func @transform_9(%arg0: i32) -> (i32, i32) {
    %c0_i32 = arith.constant 0 : i32
    %c0_i32_0 = arith.constant 0 : i32
    %c0_i32_1 = arith.constant 0 : i32
    return %c0_i32, %c0_i32_0 : i32, i32
  }
  func.func @transform_10(%arg0: i32) -> (i32, i32) {
    %c0_i32 = arith.constant 0 : i32
    %c0_i32_0 = arith.constant 0 : i32
    %c0_i32_1 = arith.constant 0 : i32
    return %c0_i32, %c0_i32_0 : i32, i32
  }
  func.func @transform_11(%arg0: i32) -> (i32, i32, i32) {
    %c0_i32 = arith.constant 0 : i32
    %c0_i32_0 = arith.constant 0 : i32
    %c0_i32_1 = arith.constant 0 : i32
    return %arg0, %c0_i32, %c0_i32_0 : i32, i32, i32
  }
}

</mosaic_0001>

<llo_original>
// kernel: tpu_custom_call.1
$region0: #{tpu_custom_call.1}
  #allocation0 [shape = 'u32[]', space=smem, size = 0x4, offset = 0x4, fixed_abs, tag = 'smem constant byte address 0x4 - core index']
  #allocation1 [shape = 'u32[144,128]{1,0:T(1,128)}', space=vmem, size = 0x12000, scoped, tag = 'internal scratch']
  %s0 = inlined_call_operand.hbm [shape: bf16[2,16,128], index: 0, kind: input, shape index: {}]
  %s1 = inlined_call_operand.hbm [shape: bf16[3,128,128], index: 1, kind: input, shape index: {}]
  %s2 = inlined_call_operand.vmem [shape: f32[1,128], index: 2, kind: input, shape index: {}]
  %s3 = inlined_call_operand.hbm [shape: bf16[3,128,128], index: 3, kind: input, shape index: {}]
  %s4 = inlined_call_operand.vmem [shape: f32[1,128], index: 4, kind: input, shape index: {}]
  %s5 = inlined_call_operand.hbm [shape: f32[128,128], index: 5, kind: input, shape index: {}]
  %s6 = inlined_call_operand.hbm [shape: f32[128,128], index: 6, kind: input, shape index: {}]
  %s7 = inlined_call_operand.hbm [shape: f32[128,128], index: 7, kind: input, shape index: {}]
  %s8 = inlined_call_operand.vmem [shape: f32[1,128], index: 8, kind: input, shape index: {}]
  %s9 = inlined_call_operand.hbm [shape: f32[128,128], index: 9, kind: input, shape index: {}]
  %s10 = inlined_call_operand.vmem [shape: f32[1,128], index: 10, kind: input, shape index: {}]
  %s11 = inlined_call_operand.vmem [shape: f32[2,12,128], index: 11, kind: output, shape index: {}]
  %s12 = sld [smem:[#allocation0]]
  $region105: #{tpu_custom_call.1} parent=0
    _
  %s14 = ssub.s32 1, %s12
  %s15 = scalar_select 0, %s14, %s12
  $region1: #{tpu_custom_call.1} parent=0
    #allocation2 [shape = 'u8[8192]{0}', space=vmem, size = 0x2000, scoped, tag = 'input window, operand 0']
    #allocation3 [shape = 's32[2]{0}', space=sflag, size = 0x8, scoped, tag = 'scoped memory for tpu_custom_call.1']
    #allocation4 [shape = 'u8[98304]{0}', space=vmem, size = 0x18000, scoped, tag = 'input window, operand 1, single buffered']
    #allocation5 [shape = 's32[1]{0}', space=sflag, size = 0x4, scoped, tag = 'scoped memory for tpu_custom_call.1']
    #allocation6 [shape = 'u8[98304]{0}', space=vmem, size = 0x18000, scoped, tag = 'input window, operand 3, single buffered']
    #allocation7 [shape = 'u8[65536]{0}', space=vmem, size = 0x10000, scoped, tag = 'input window, operand 5, single buffered']
    #allocation8 [shape = 's32[1]{0}', space=sflag, size = 0x4, scoped, tag = 'scoped memory for tpu_custom_call.1']
    #allocation9 [shape = 'u8[65536]{0}', space=vmem, size = 0x10000, scoped, tag = 'input window, operand 6, single buffered']
    #allocation10 [shape = 'u8[65536]{0}', space=vmem, size = 0x10000, scoped, tag = 'input window, operand 7, single buffered']
    #allocation11 [shape = 's32[1]{0}', space=sflag, size = 0x4, scoped, tag = 'scoped memory for tpu_custom_call.1']
    #allocation12 [shape = 'u8[65536]{0}', space=vmem, size = 0x10000, scoped, tag = 'input window, operand 9, single buffered']
    %16 = vsyncpa [#allocation3], 0
    %s17 = scalar_lea.sflag [#allocation3], 1
    %18 = vsyncpa %s17, 0
    %19 = vsyncpa [#allocation5], 0
    %20 = vsyncpa [#allocation8], 0
    %21 = vsyncpa [#allocation11], 0
    loop: start=0, step=1, limit=4
    $region2: #{tpu_custom_call.1} parent=1 // loop_pre_header
      _
    $region3: #{tpu_custom_call.1} parent=1 // loop_header
      %s23 = sphi 0, %s27
      %p24 = scmp.ge.s32.totalorder %s23, 4
      %s33 = sphi 0, %s35
      %s36 = sphi 0, %s33
      %s37 = sphi 0, %s36
      %s53 = sphi 0, %s37
      %s57 = sphi 0, %s57
      %s59 = sphi 0, %s57
      %s60 = sphi 0, %s59
      %s74 = sphi 0, %s60
      %s78 = sphi 0, %s78
      %s80 = sphi 0, %s78
      %s81 = sphi 0, %s80
      %s95 = sphi 0, %s81
      %s99 = sphi 0, %s99
      %s101 = sphi 0, %s99
      %s102 = sphi 0, %s101
      %s116 = sphi 0, %s102
      %s120 = sphi 0, %s120
      %s122 = sphi 0, %s120
      %s123 = sphi 0, %s122
      %s137 = sphi 0, %s123
      %s141 = sphi 0, %s141
      %s143 = sphi 0, %s141
      %s144 = sphi 0, %s143
      %s158 = sphi 0, %s144
      %s162 = sphi 0, %s162
      %s164 = sphi 0, %s162
      %s165 = sphi 0, %s164
      %s179 = sphi 0, %s165
      %s183 = sphi 0, %s183
      %s185 = sphi 0, %s183
      %s186 = sphi 0, %s185
      %s200 = sphi 0, %s186
      %s204 = sphi 0, %s204
      %s206 = sphi 0, %s204
      %s207 = sphi 0, %s206
      %s221 = sphi 0, %s207
      %s225 = sphi 0, %s225
      %s227 = sphi 0, %s225
      %s228 = sphi 0, %s227
      %s242 = sphi 0, %s228
      %s246 = sphi 0, %s246
      %s248 = sphi 0, %s246
      %s249 = sphi 0, %s248
      %s263 = sphi 0, %s249
      %s269 = sphi 0, %s271
      %s272 = sphi 0, %s269
      %s273 = sphi 0, %s272
      %s289 = sphi 0, %s273
    $region4: #{tpu_custom_call.1} parent=1 // loop_header_branch
      %26 = sbr.rel (%p24) target = $region8
    $region5: #{tpu_custom_call.1} parent=1 // loop_body
      %s28 = ssub.s32 %s23, 1
      %s29 = ssub.s32 %s23, 2
      %s30 = sadd.s32 %s23, 1
      %s31 = ssub.s32 %s23, %s30
      %p32 = scmp.eq.s32.totalorder %s31, 0
      %s34 = sadd.s32 %s33, 1
      %s35 = scalar_select %p32, %s33, %s34
      %p38 = pneg %p32
      %p39 = scmp.eq.s32.totalorder %s23, 1
      %p40 = por %p38, %p39
      %p41 = scmp.ne.s32.totalorder %s33, %s36
      %p42 = scmp.eq.s32.totalorder %s23, 0
      %p43 = por %p41, %p42
      %p44 = scmp.ne.s32.totalorder %s33, %s36
      %p45 = scmp.eq.s32.totalorder %s28, 1
      %p46 = por %p44, %p45
      %p47 = scmp.ne.s32.totalorder %s36, %s37
      %p48 = scmp.eq.s32.totalorder %s28, 0
      %p49 = por %p47, %p48
      %p50 = scmp.ne.s32.totalorder %s36, %s37
      %p51 = scmp.eq.s32.totalorder %s29, 1
      %p52 = por %p50, %p51
      %p54 = scmp.ne.s32.totalorder %s37, %s53
      %p55 = scmp.eq.s32.totalorder %s29, 0
      %p56 = por %p54, %p55
      %s58 = sadd.s32 %s57, 1
      %p61 = scmp.eq.s32.totalorder %s23, 1
      %p62 = scmp.ne.s32.totalorder %s57, %s59
      %p63 = scmp.eq.s32.totalorder %s23, 0
      %p64 = por %p62, %p63
      %p65 = scmp.ne.s32.totalorder %s57, %s59
      %p66 = scmp.eq.s32.totalorder %s28, 1
      %p67 = por %p65, %p66
      %p68 = scmp.ne.s32.totalorder %s59, %s60
      %p69 = scmp.eq.s32.totalorder %s28, 0
      %p70 = por %p68, %p69
      %p71 = scmp.ne.s32.totalorder %s59, %s60
      %p72 = scmp.eq.s32.totalorder %s29, 1
      %p73 = por %p71, %p72
      %p75 = scmp.ne.s32.totalorder %s60, %s74
      %p76 = scmp.eq.s32.totalorder %s29, 0
      %p77 = por %p75, %p76
      %s79 = sadd.s32 %s78, 1
      %p82 = scmp.eq.s32.totalorder %s23, 1
      %p83 = scmp.ne.s32.totalorder %s78, %s80
      %p84 = scmp.eq.s32.totalorder %s23, 0
      %p85 = por %p83, %p84
      %p86 = scmp.ne.s32.totalorder %s78, %s80
      %p87 = scmp.eq.s32.totalorder %s28, 1
      %p88 = por %p86, %p87
      %p89 = scmp.ne.s32.totalorder %s80, %s81
      %p90 = scmp.eq.s32.totalorder %s28, 0
      %p91 = por %p89, %p90
      %p92 = scmp.ne.s32.totalorder %s80, %s81
      %p93 = scmp.eq.s32.totalorder %s29, 1
      %p94 = por %p92, %p93
      %p96 = scmp.ne.s32.totalorder %s81, %s95
      %p97 = scmp.eq.s32.totalorder %s29, 0
      %p98 = por %p96, %p97
      %s100 = sadd.s32 %s99, 1
      %p103 = scmp.eq.s32.totalorder %s23, 1
      %p104 = scmp.ne.s32.totalorder %s99, %s101
      %p105 = scmp.eq.s32.totalorder %s23, 0
      %p106 = por %p104, %p105
      %p107 = scmp.ne.s32.totalorder %s99, %s101
      %p108 = scmp.eq.s32.totalorder %s28, 1
      %p109 = por %p107, %p108
      %p110 = scmp.ne.s32.totalorder %s101, %s102
      %p111 = scmp.eq.s32.totalorder %s28, 0
      %p112 = por %p110, %p111
      %p113 = scmp.ne.s32.totalorder %s101, %s102
      %p114 = scmp.eq.s32.totalorder %s29, 1
      %p115 = por %p113, %p114
      %p117 = scmp.ne.s32.totalorder %s102, %s116
      %p118 = scmp.eq.s32.totalorder %s29, 0
      %p119 = por %p117, %p118
      %s121 = sadd.s32 %s120, 1
      %p124 = scmp.eq.s32.totalorder %s23, 1
      %p125 = scmp.ne.s32.totalorder %s120, %s122
      %p126 = scmp.eq.s32.totalorder %s23, 0
      %p127 = por %p125, %p126
      %p128 = scmp.ne.s32.totalorder %s120, %s122
      %p129 = scmp.eq.s32.totalorder %s28, 1
      %p130 = por %p128, %p129
      %p131 = scmp.ne.s32.totalorder %s122, %s123
      %p132 = scmp.eq.s32.totalorder %s28, 0
      %p133 = por %p131, %p132
      %p134 = scmp.ne.s32.totalorder %s122, %s123
      %p135 = scmp.eq.s32.totalorder %s29, 1
      %p136 = por %p134, %p135
      %p138 = scmp.ne.s32.totalorder %s123, %s137
      %p139 = scmp.eq.s32.totalorder %s29, 0
      %p140 = por %p138, %p139
      %s142 = sadd.s32 %s141, 1
      %p145 = scmp.eq.s32.totalorder %s23, 1
      %p146 = scmp.ne.s32.totalorder %s141, %s143
      %p147 = scmp.eq.s32.totalorder %s23, 0
      %p148 = por %p146, %p147
      %p149 = scmp.ne.s32.totalorder %s141, %s143
      %p150 = scmp.eq.s32.totalorder %s28, 1
      %p151 = por %p149, %p150
      %p152 = scmp.ne.s32.totalorder %s143, %s144
      %p153 = scmp.eq.s32.totalorder %s28, 0
      %p154 = por %p152, %p153
      %p155 = scmp.ne.s32.totalorder %s143, %s144
      %p156 = scmp.eq.s32.totalorder %s29, 1
      %p157 = por %p155, %p156
      %p159 = scmp.ne.s32.totalorder %s144, %s158
      %p160 = scmp.eq.s32.totalorder %s29, 0
      %p161 = por %p159, %p160
      %s163 = sadd.s32 %s162, 1
      %p166 = scmp.eq.s32.totalorder %s23, 1
      %p167 = scmp.ne.s32.totalorder %s162, %s164
      %p168 = scmp.eq.s32.totalorder %s23, 0
      %p169 = por %p167, %p168
      %p170 = scmp.ne.s32.totalorder %s162, %s164
      %p171 = scmp.eq.s32.totalorder %s28, 1
      %p172 = por %p170, %p171
      %p173 = scmp.ne.s32.totalorder %s164, %s165
      %p174 = scmp.eq.s32.totalorder %s28, 0
      %p175 = por %p173, %p174
      %p176 = scmp.ne.s32.totalorder %s164, %s165
      %p177 = scmp.eq.s32.totalorder %s29, 1
      %p178 = por %p176, %p177
      %p180 = scmp.ne.s32.totalorder %s165, %s179
      %p181 = scmp.eq.s32.totalorder %s29, 0
      %p182 = por %p180, %p181
      %s184 = sadd.s32 %s183, 1
      %p187 = scmp.eq.s32.totalorder %s23, 1
      %p188 = scmp.ne.s32.totalorder %s183, %s185
      %p189 = scmp.eq.s32.totalorder %s23, 0
      %p190 = por %p188, %p189
      %p191 = scmp.ne.s32.totalorder %s183, %s185
      %p192 = scmp.eq.s32.totalorder %s28, 1
      %p193 = por %p191, %p192
      %p194 = scmp.ne.s32.totalorder %s185, %s186
      %p195 = scmp.eq.s32.totalorder %s28, 0
      %p196 = por %p194, %p195
      %p197 = scmp.ne.s32.totalorder %s185, %s186
      %p198 = scmp.eq.s32.totalorder %s29, 1
      %p199 = por %p197, %p198
      %p201 = scmp.ne.s32.totalorder %s186, %s200
      %p202 = scmp.eq.s32.totalorder %s29, 0
      %p203 = por %p201, %p202
      %s205 = sadd.s32 %s204, 1
      %p208 = scmp.eq.s32.totalorder %s23, 1
      %p209 = scmp.ne.s32.totalorder %s204, %s206
      %p210 = scmp.eq.s32.totalorder %s23, 0
      %p211 = por %p209, %p210
      %p212 = scmp.ne.s32.totalorder %s204, %s206
      %p213 = scmp.eq.s32.totalorder %s28, 1
      %p214 = por %p212, %p213
      %p215 = scmp.ne.s32.totalorder %s206, %s207
      %p216 = scmp.eq.s32.totalorder %s28, 0
      %p217 = por %p215, %p216
      %p218 = scmp.ne.s32.totalorder %s206, %s207
      %p219 = scmp.eq.s32.totalorder %s29, 1
      %p220 = por %p218, %p219
      %p222 = scmp.ne.s32.totalorder %s207, %s221
      %p223 = scmp.eq.s32.totalorder %s29, 0
      %p224 = por %p222, %p223
      %s226 = sadd.s32 %s225, 1
      %p229 = scmp.eq.s32.totalorder %s23, 1
      %p230 = scmp.ne.s32.totalorder %s225, %s227
      %p231 = scmp.eq.s32.totalorder %s23, 0
      %p232 = por %p230, %p231
      %p233 = scmp.ne.s32.totalorder %s225, %s227
      %p234 = scmp.eq.s32.totalorder %s28, 1
      %p235 = por %p233, %p234
      %p236 = scmp.ne.s32.totalorder %s227, %s228
      %p237 = scmp.eq.s32.totalorder %s28, 0
      %p238 = por %p236, %p237
      %p239 = scmp.ne.s32.totalorder %s227, %s228
      %p240 = scmp.eq.s32.totalorder %s29, 1
      %p241 = por %p239, %p240
      %p243 = scmp.ne.s32.totalorder %s228, %s242
      %p244 = scmp.eq.s32.totalorder %s29, 0
      %p245 = por %p243, %p244
      %s247 = sadd.s32 %s246, 1
      %p250 = scmp.eq.s32.totalorder %s23, 1
      %p251 = scmp.ne.s32.totalorder %s246, %s248
      %p252 = scmp.eq.s32.totalorder %s23, 0
      %p253 = por %p251, %p252
      %p254 = scmp.ne.s32.totalorder %s246, %s248
      %p255 = scmp.eq.s32.totalorder %s28, 1
      %p256 = por %p254, %p255
      %p257 = scmp.ne.s32.totalorder %s248, %s249
      %p258 = scmp.eq.s32.totalorder %s28, 0
      %p259 = por %p257, %p258
      %p260 = scmp.ne.s32.totalorder %s248, %s249
      %p261 = scmp.eq.s32.totalorder %s29, 1
      %p262 = por %p260, %p261
      %p264 = scmp.ne.s32.totalorder %s249, %s263
      %p265 = scmp.eq.s32.totalorder %s29, 0
      %p266 = por %p264, %p265
      %s267 = ssub.s32 %s23, %s30
      %p268 = scmp.eq.s32.totalorder %s267, 0
      %s270 = sadd.s32 %s269, 1
      %s271 = scalar_select %p268, %s269, %s270
      %p274 = pneg %p268
      %p275 = scmp.eq.s32.totalorder %s23, 1
      %p276 = por %p274, %p275
      %p277 = scmp.ne.s32.totalorder %s269, %s272
      %p278 = scmp.eq.s32.totalorder %s23, 0
      %p279 = por %p277, %p278
      %p280 = scmp.ne.s32.totalorder %s269, %s272
      %p281 = scmp.eq.s32.totalorder %s28, 1
      %p282 = por %p280, %p281
      %p283 = scmp.ne.s32.totalorder %s272, %s273
      %p284 = scmp.eq.s32.totalorder %s28, 0
      %p285 = por %p283, %p284
      %p286 = scmp.ne.s32.totalorder %s272, %s273
      %p287 = scmp.eq.s32.totalorder %s29, 1
      %p288 = por %p286, %p287
      %p290 = scmp.ne.s32.totalorder %s273, %s289
      %p291 = scmp.eq.s32.totalorder %s29, 0
      %p292 = por %p290, %p291
      %p293 = scmp.le.s32.totalorder 1, %s23
      %p294 = scmp.lt.s32.totalorder %s23, 3
      %p295 = pnand %p293, %p294
      %p296 = pneg %p295
      // Predicated region
      $region9: #{tpu_custom_call.1} parent=5 // pred_check
        _
      $region10: #{tpu_custom_call.1} parent=5 // pred_check_branch
        %298 = sbr.rel (%p295) target = $region12
      $region11: #{tpu_custom_call.1} parent=5 // pred_region
        %s299 = ssub.s32 %s23, 1
        // Predicated region
        $region13: #{tpu_custom_call.1} parent=11 // pred_check
          %p300 = pneg %p70
        $region14: #{tpu_custom_call.1} parent=11 // pred_check_branch
          %302 = sbr.rel (%p300) target = $region16
        $region15: #{tpu_custom_call.1} parent=11 // pred_region
          %s304 = ssub.s32 3072, 3072
          %305 = vsyncadd [#allocation5], %s304
          %s306 = sshll.u32 [#allocation4], 4
          %s307 = int_to_ptr.vmem [resolvable:$true] %s306
          %312 = dma.hbm_to_vmem [thread:$0]  %s1, 3072, %s307, [#allocation5], 64, 64, 4
        $region16: #{tpu_custom_call.1} parent=11 // pred_fallthru
          _
        // Predicated region
        $region17: #{tpu_custom_call.1} parent=11 // pred_check
          %p313 = pneg %p91
        $region18: #{tpu_custom_call.1} parent=11 // pred_check_branch
          %315 = sbr.rel (%p313) target = $region20
        $region19: #{tpu_custom_call.1} parent=11 // pred_region
          _
        $region20: #{tpu_custom_call.1} parent=11 // pred_fallthru
          _
        // Predicated region
        $region21: #{tpu_custom_call.1} parent=11 // pred_check
          %p316 = pneg %p112
        $region22: #{tpu_custom_call.1} parent=11 // pred_check_branch
          %318 = sbr.rel (%p316) target = $region24
        $region23: #{tpu_custom_call.1} parent=11 // pred_region
          %s320 = ssub.s32 3072, 3072
          %321 = vsyncadd [#allocation5], %s320
          %s322 = sshll.u32 [#allocation6], 4
          %s323 = int_to_ptr.vmem [resolvable:$true] %s322
          %328 = dma.hbm_to_vmem [thread:$0]  %s3, 3072, %s323, [#allocation5], 64, 64, 4
        $region24: #{tpu_custom_call.1} parent=11 // pred_fallthru
          _
        // Predicated region
        $region25: #{tpu_custom_call.1} parent=11 // pred_check
          %p329 = pneg %p133
        $region26: #{tpu_custom_call.1} parent=11 // pred_check_branch
          %331 = sbr.rel (%p329) target = $region28
        $region27: #{tpu_custom_call.1} parent=11 // pred_region
          _
        $region28: #{tpu_custom_call.1} parent=11 // pred_fallthru
          _
        // Predicated region
        $region29: #{tpu_custom_call.1} parent=11 // pred_check
          %p332 = pneg %p154
        $region30: #{tpu_custom_call.1} parent=11 // pred_check_branch
          %334 = sbr.rel (%p332) target = $region32
        $region31: #{tpu_custom_call.1} parent=11 // pred_region
          %s336 = ssub.s32 2048, 2048
          %337 = vsyncadd [#allocation8], %s336
          %s338 = sshll.u32 [#allocation7], 4
          %s339 = int_to_ptr.vmem [resolvable:$true] %s338
          %344 = dma.hbm_to_vmem [thread:$0]  %s5, 2048, %s339, [#allocation8], 128, 128, 8
        $region32: #{tpu_custom_call.1} parent=11 // pred_fallthru
          _
        // Predicated region
        $region33: #{tpu_custom_call.1} parent=11 // pred_check
          %p345 = pneg %p175
        $region34: #{tpu_custom_call.1} parent=11 // pred_check_branch
          %347 = sbr.rel (%p345) target = $region36
        $region35: #{tpu_custom_call.1} parent=11 // pred_region
          %s349 = ssub.s32 2048, 2048
          %350 = vsyncadd [#allocation8], %s349
          %s351 = sshll.u32 [#allocation9], 4
          %s352 = int_to_ptr.vmem [resolvable:$true] %s351
          %357 = dma.hbm_to_vmem [thread:$0]  %s6, 2048, %s352, [#allocation8], 128, 128, 8
        $region36: #{tpu_custom_call.1} parent=11 // pred_fallthru
          _
        // Predicated region
        $region37: #{tpu_custom_call.1} parent=11 // pred_check
          %p358 = pneg %p196
        $region38: #{tpu_custom_call.1} parent=11 // pred_check_branch
          %360 = sbr.rel (%p358) target = $region40
        $region39: #{tpu_custom_call.1} parent=11 // pred_region
          %s362 = ssub.s32 2048, 2048
          %363 = vsyncadd [#allocation11], %s362
          %s364 = sshll.u32 [#allocation10], 4
          %s365 = int_to_ptr.vmem [resolvable:$true] %s364
          %370 = dma.hbm_to_vmem [thread:$0]  %s7, 2048, %s365, [#allocation11], 128, 128, 8
        $region40: #{tpu_custom_call.1} parent=11 // pred_fallthru
          _
        // Predicated region
        $region41: #{tpu_custom_call.1} parent=11 // pred_check
          %p371 = pneg %p217
        $region42: #{tpu_custom_call.1} parent=11 // pred_check_branch
          %373 = sbr.rel (%p371) target = $region44
        $region43: #{tpu_custom_call.1} parent=11 // pred_region
          _
        $region44: #{tpu_custom_call.1} parent=11 // pred_fallthru
          _
        // Predicated region
        $region45: #{tpu_custom_call.1} parent=11 // pred_check
          %p374 = pneg %p238
        $region46: #{tpu_custom_call.1} parent=11 // pred_check_branch
          %376 = sbr.rel (%p374) target = $region48
        $region47: #{tpu_custom_call.1} parent=11 // pred_region
          %s378 = ssub.s32 2048, 2048
          %379 = vsyncadd [#allocation11], %s378
          %s380 = sshll.u32 [#allocation12], 4
          %s381 = int_to_ptr.vmem [resolvable:$true] %s380
          %386 = dma.hbm_to_vmem [thread:$0]  %s9, 2048, %s381, [#allocation11], 128, 128, 8
        $region48: #{tpu_custom_call.1} parent=11 // pred_fallthru
          _
        // Predicated region
        $region49: #{tpu_custom_call.1} parent=11 // pred_check
          %p387 = pneg %p259
        $region50: #{tpu_custom_call.1} parent=11 // pred_check_branch
          %389 = sbr.rel (%p387) target = $region52
        $region51: #{tpu_custom_call.1} parent=11 // pred_region
          _
        $region52: #{tpu_custom_call.1} parent=11 // pred_fallthru
          _
      $region12: #{tpu_custom_call.1} parent=5 // pred_fallthru
        _
      %p390 = scmp.lt.s32.totalorder %s23, 2
      // Predicated region
      $region53: #{tpu_custom_call.1} parent=5 // pred_check
        %p391 = pneg %p390
      $region54: #{tpu_custom_call.1} parent=5 // pred_check_branch
        %393 = sbr.rel (%p391) target = $region56
      $region55: #{tpu_custom_call.1} parent=5 // pred_region
        // Predicated region
        $region57: #{tpu_custom_call.1} parent=55 // pred_check
          %p394 = pneg %p43
        $region58: #{tpu_custom_call.1} parent=55 // pred_check_branch
          %396 = sbr.rel (%p394) target = $region60
        $region59: #{tpu_custom_call.1} parent=55 // pred_region
          %s397 = sand.u32 %s33, 1
          %s398 = scalar_lea.sflag [#allocation3], %s397
          %s399 = sand.u32 %s33, 1
          %s400 = smul.addr %s399, 8
          %s401 = scalar_lea.vmem [#allocation2], %s400
          %s403 = ssub.s32 128, 128
          %404 = vsyncadd %s398, %s403
          %s405 = smul.addr %s23, 2
          %s406 = smul.addr %s405, 64
          %s407 = scalar_lea.hbm %s0, %s406
          %s408 = sshll.u32 %s401, 4
          %s409 = int_to_ptr.vmem [resolvable:$true] %s408
          %414 = dma.hbm_to_vmem [thread:$0]  %s407, 128, %s409, %s398, 64, 64, 4
        $region60: #{tpu_custom_call.1} parent=55 // pred_fallthru
          _
      $region56: #{tpu_custom_call.1} parent=5 // pred_fallthru
        _
      %p415 = scmp.le.s32.totalorder 1, %s23
      %p416 = scmp.lt.s32.totalorder %s23, 3
      %p417 = pnand %p415, %p416
      %p418 = pneg %p417
      // Predicated region
      $region61: #{tpu_custom_call.1} parent=5 // pred_check
        _
      $region62: #{tpu_custom_call.1} parent=5 // pred_check_branch
        %420 = sbr.rel (%p417) target = $region64
      $region63: #{tpu_custom_call.1} parent=5 // pred_region
        %s421 = ssub.s32 %s23, 1
        %s422 = sand.u32 %s36, 1
        %s423 = scalar_lea.sflag [#allocation3], %s422
        %s424 = sand.u32 %s36, 1
        %s425 = smul.addr %s424, 8
        %s426 = scalar_lea.vmem [#allocation2], %s425
        // Predicated region
        $region65: #{tpu_custom_call.1} parent=63 // pred_check
          %p427 = pneg %p49
        $region66: #{tpu_custom_call.1} parent=63 // pred_check_branch
          %429 = sbr.rel (%p427) target = $region68
        $region67: #{tpu_custom_call.1} parent=63 // pred_region
          %430 = dma.done %s423, 128
        $region68: #{tpu_custom_call.1} parent=63 // pred_fallthru
          _
        // Predicated region
        $region69: #{tpu_custom_call.1} parent=63 // pred_check
          %p431 = pneg %p70
        $region70: #{tpu_custom_call.1} parent=63 // pred_check_branch
          %433 = sbr.rel (%p431) target = $region72
        $region71: #{tpu_custom_call.1} parent=63 // pred_region
          %434 = dma.done [#allocation5], 3072
        $region72: #{tpu_custom_call.1} parent=63 // pred_fallthru
          _
        // Predicated region
        $region73: #{tpu_custom_call.1} parent=63 // pred_check
          %p435 = pneg %p112
        $region74: #{tpu_custom_call.1} parent=63 // pred_check_branch
          %437 = sbr.rel (%p435) target = $region76
        $region75: #{tpu_custom_call.1} parent=63 // pred_region
          %438 = dma.done [#allocation5], 3072
        $region76: #{tpu_custom_call.1} parent=63 // pred_fallthru
          _
        // Predicated region
        $region77: #{tpu_custom_call.1} parent=63 // pred_check
          %p439 = pneg %p154
        $region78: #{tpu_custom_call.1} parent=63 // pred_check_branch
          %441 = sbr.rel (%p439) target = $region80
        $region79: #{tpu_custom_call.1} parent=63 // pred_region
          %442 = dma.done [#allocation8], 2048
        $region80: #{tpu_custom_call.1} parent=63 // pred_fallthru
          _
        // Predicated region
        $region81: #{tpu_custom_call.1} parent=63 // pred_check
          %p443 = pneg %p175
        $region82: #{tpu_custom_call.1} parent=63 // pred_check_branch
          %445 = sbr.rel (%p443) target = $region84
        $region83: #{tpu_custom_call.1} parent=63 // pred_region
          %446 = dma.done [#allocation8], 2048
        $region84: #{tpu_custom_call.1} parent=63 // pred_fallthru
          _
        // Predicated region
        $region85: #{tpu_custom_call.1} parent=63 // pred_check
          %p447 = pneg %p196
        $region86: #{tpu_custom_call.1} parent=63 // pred_check_branch
          %449 = sbr.rel (%p447) target = $region88
        $region87: #{tpu_custom_call.1} parent=63 // pred_region
          %450 = dma.done [#allocation11], 2048
        $region88: #{tpu_custom_call.1} parent=63 // pred_fallthru
          _
        // Predicated region
        $region89: #{tpu_custom_call.1} parent=63 // pred_check
          %p451 = pneg %p238
        $region90: #{tpu_custom_call.1} parent=63 // pred_check_branch
          %453 = sbr.rel (%p451) target = $region92
        $region91: #{tpu_custom_call.1} parent=63 // pred_region
          %454 = dma.done [#allocation11], 2048
        $region92: #{tpu_custom_call.1} parent=63 // pred_fallthru
          _
        %s455 = sand.u32 %s36, 1
        %s456 = scalar_lea.sflag [#allocation3], %s455
        %s457 = sand.u32 %s36, 1
        %s458 = smul.addr %s457, 8
        %s459 = scalar_lea.vmem [#allocation2], %s458
        %p460 = pneg %p49
        %p461 = pneg %p46
        %p462 = pneg %p70
        %p463 = pneg %p67
        %p464 = pneg %p91
        %p465 = pneg %p88
        %p466 = pneg %p112
        %p467 = pneg %p109
        %p468 = pneg %p133
        %p469 = pneg %p130
        %p470 = pneg %p154
        %p471 = pneg %p151
        %p472 = pneg %p175
        %p473 = pneg %p172
        %p474 = pneg %p196
        %p475 = pneg %p193
        %p476 = pneg %p217
        %p477 = pneg %p214
        %p478 = pneg %p238
        %p479 = pneg %p235
        %p480 = pneg %p259
        %p481 = pneg %p256
        %p482 = pneg %p285
        %p483 = pneg %p282
        %p484 = scmp.lt.s32.totalorder %s28, 1
        %s485 = scalar_select %p484, %s28, 1
        %s486 = smul.addr %s485, 2
        %s487 = smul.addr %s486, 8
        %s488 = scalar_lea.vmem %s11, %s487
        %p489 = scmp.lt.s32.totalorder %s28, 1
        %s490 = scalar_select %p489, %s28, 1
        %s491 = smul.addr %s490, 2
        %s492 = smul.addr %s491, 8
        %s493 = scalar_lea.vmem %s11, %s492
        %v495 = vld [vmem:[%s426] sm:$0xf]
        %v496 = vld [vmem:[%s426 + $0x4] sm:$0xf]
        %v497 = vld [vmem:[%s2] sm:$0x1]
        %v498 = vld [vmem:[#allocation4] sm:$0xf]
        %v499 = vld [vmem:[#allocation4 + $0x4] sm:$0xf]
        %v500 = vld [vmem:[#allocation4 + $0x8] sm:$0xf]
        %v501 = vld [vmem:[#allocation4 + $0xc] sm:$0xf]
        %v502 = vld [vmem:[#allocation4 + $0x10] sm:$0xf]
        %v503 = vld [vmem:[#allocation4 + $0x14] sm:$0xf]
        %v504 = vld [vmem:[#allocation4 + $0x18] sm:$0xf]
        %v505 = vld [vmem:[#allocation4 + $0x1c] sm:$0xf]
        %v506 = vld [vmem:[#allocation4 + $0x20] sm:$0xf]
        %v507 = vld [vmem:[#allocation4 + $0x24] sm:$0xf]
        %v508 = vld [vmem:[#allocation4 + $0x28] sm:$0xf]
        %v509 = vld [vmem:[#allocation4 + $0x2c] sm:$0xf]
        %v510 = vld [vmem:[#allocation4 + $0x30] sm:$0xf]
        %v511 = vld [vmem:[#allocation4 + $0x34] sm:$0xf]
        %v512 = vld [vmem:[#allocation4 + $0x38] sm:$0xf]
        %v513 = vld [vmem:[#allocation4 + $0x3c] sm:$0xf]
        %v516 = vunpack.c.l.b16 %v495
        %v517 = vunpack.c.l.b16 %v496
        %v518 = vpack.c.b16 %v517, %v516
        %v520 = vshrl.u32 %v518, 16
        %v522 = vshll.u32 %v518, 16
        %v524 = vrot.slane %v522, 1
        %v525 = vor.u32 %v520, %v524
        %vm527 = vcmask 1047552
        %vm528 = vsmask.f32 7424
        %vm529 = vmand %vm527, %vm528
        %v530 = vsel %vm529, %v525, 0
        %s531 = scalar_lea.vmem [#allocation4], 64
        %v532 = vld [vmem:[%s531] sm:$0xf]
        %v533 = vld [vmem:[%s531 + $0x4] sm:$0xf]
        %v534 = vld [vmem:[%s531 + $0x8] sm:$0xf]
        %v535 = vld [vmem:[%s531 + $0xc] sm:$0xf]
        %v536 = vld [vmem:[%s531 + $0x10] sm:$0xf]
        %v537 = vld [vmem:[%s531 + $0x14] sm:$0xf]
        %v538 = vld [vmem:[%s531 + $0x18] sm:$0xf]
        %v539 = vld [vmem:[%s531 + $0x1c] sm:$0xf]
        %v540 = vld [vmem:[%s531 + $0x20] sm:$0xf]
        %v541 = vld [vmem:[%s531 + $0x24] sm:$0xf]
        %v542 = vld [vmem:[%s531 + $0x28] sm:$0xf]
        %v543 = vld [vmem:[%s531 + $0x2c] sm:$0xf]
        %v544 = vld [vmem:[%s531 + $0x30] sm:$0xf]
        %v545 = vld [vmem:[%s531 + $0x34] sm:$0xf]
        %v546 = vld [vmem:[%s531 + $0x38] sm:$0xf]
        %v547 = vld [vmem:[%s531 + $0x3c] sm:$0xf]
        %v564 = vunpack.c.l.b16 %v532
        %v565 = vunpack.c.l.b16 %v533
        %v566 = vunpack.c.l.b16 %v534
        %v567 = vunpack.c.l.b16 %v535
        %v568 = vunpack.c.l.b16 %v536
        %v569 = vunpack.c.l.b16 %v537
        %v570 = vunpack.c.l.b16 %v538
        %v571 = vunpack.c.l.b16 %v539
        %v572 = vunpack.c.l.b16 %v540
        %v573 = vunpack.c.l.b16 %v541
        %v574 = vunpack.c.l.b16 %v542
        %v575 = vunpack.c.l.b16 %v543
        %v576 = vunpack.c.l.b16 %v544
        %v577 = vunpack.c.l.b16 %v545
        %v578 = vunpack.c.l.b16 %v546
        %v579 = vunpack.c.l.b16 %v547
        %v580 = vpack.c.b16 %v565, %v564
        %v581 = vpack.c.b16 %v567, %v566
        %v582 = vpack.c.b16 %v569, %v568
        %v583 = vpack.c.b16 %v571, %v570
        %v584 = vpack.c.b16 %v573, %v572
        %v585 = vpack.c.b16 %v575, %v574
        %v586 = vpack.c.b16 %v577, %v576
        %v587 = vpack.c.b16 %v579, %v578
        %596 = vmatprep.subr.bf16.mxu0 0
        %597 = vmatpush1.bf16.msra.mxu0 %v580
        %598 = vmatprep.subr.bf16.mxu0 0
        %599 = vmatpush1.bf16.msra.mxu0 %v581
        %600 = vmatprep.subr.bf16.mxu0 0
        %601 = vmatpush1.bf16.msra.mxu0 %v582
        %602 = vmatprep.subr.bf16.mxu0 0
        %603 = vmatpush1.bf16.msra.mxu0 %v583
        %604 = vmatprep.subr.bf16.mxu0 0
        %605 = vmatpush1.bf16.msra.mxu0 %v584
        %606 = vmatprep.subr.bf16.mxu0 0
        %607 = vmatpush1.bf16.msra.mxu0 %v585
        %608 = vmatprep.subr.bf16.mxu0 0
        %609 = vmatpush1.bf16.msra.mxu0 %v586
        %610 = vmatprep.subr.bf16.mxu0 0
        %611 = vmatpush1.bf16.msra.mxu0 %v587
        %612 = vmatprep.subr.bf16.mxu0 0
        %613 = vmatpush1.bf16.msra.mxu0 0
        %614 = vmatprep.subr.bf16.mxu0 0
        %615 = vmatpush1.bf16.msra.mxu0 0
        %616 = vmatprep.subr.bf16.mxu0 0
        %617 = vmatpush1.bf16.msra.mxu0 0
        %618 = vmatprep.subr.bf16.mxu0 0
        %619 = vmatpush1.bf16.msra.mxu0 0
        %620 = vmatprep.subr.bf16.mxu0 0
        %621 = vmatpush1.bf16.msra.mxu0 0
        %622 = vmatprep.subr.bf16.mxu0 0
        %623 = vmatpush1.bf16.msra.mxu0 0
        %624 = vmatprep.subr.bf16.mxu0 0
        %625 = vmatpush1.bf16.msra.mxu0 0
        %626 = vmatprep.subr.bf16.mxu0 0
        %627 = vmatpush1.bf16.msra.mxu0 0
        %628 = vmatprep.mubr.bf16.mxu0 0
        %629 = vmatmul.mubr.bf16.gmra.mrb[0].mxu0 %v530
        %v630 = vpop.f32.mrb[0].mxu0
        %v631 = vadd.f32 0.0, %v630
        %v632 = vpop.f32.mrb[0].mxu0
        %v633 = vpop.f32.mrb[0].mxu0
        %v634 = vadd.f32 0.0, %v633
        %v635 = vpop.f32.mrb[0].mxu0
        %636 = vdwg.mxu0
        %v654 = vunpack.c.l.b16 %v498
        %v655 = vunpack.c.l.b16 %v499
        %v656 = vunpack.c.l.b16 %v500
        %v657 = vunpack.c.l.b16 %v501
        %v658 = vunpack.c.l.b16 %v502
        %v659 = vunpack.c.l.b16 %v503
        %v660 = vunpack.c.l.b16 %v504
        %v661 = vunpack.c.l.b16 %v505
        %v662 = vunpack.c.l.b16 %v506
        %v663 = vunpack.c.l.b16 %v507
        %v664 = vunpack.c.l.b16 %v508
        %v665 = vunpack.c.l.b16 %v509
        %v666 = vunpack.c.l.b16 %v510
        %v667 = vunpack.c.l.b16 %v511
        %v668 = vunpack.c.l.b16 %v512
        %v669 = vunpack.c.l.b16 %v513
        %v670 = vpack.c.b16 %v655, %v654
        %v671 = vpack.c.b16 %v657, %v656
        %v672 = vpack.c.b16 %v659, %v658
        %v673 = vpack.c.b16 %v661, %v660
        %v674 = vpack.c.b16 %v663, %v662
        %v675 = vpack.c.b16 %v665, %v664
        %v676 = vpack.c.b16 %v667, %v666
        %v677 = vpack.c.b16 %v669, %v668
        %686 = vmatprep.subr.bf16.mxu0 0
        %687 = vmatpush1.bf16.msra.mxu0 %v670
        %688 = vmatprep.subr.bf16.mxu0 0
        %689 = vmatpush1.bf16.msra.mxu0 %v671
        %690 = vmatprep.subr.bf16.mxu0 0
        %691 = vmatpush1.bf16.msra.mxu0 %v672
        %692 = vmatprep.subr.bf16.mxu0 0
        %693 = vmatpush1.bf16.msra.mxu0 %v673
        %694 = vmatprep.subr.bf16.mxu0 0
        %695 = vmatpush1.bf16.msra.mxu0 %v674
        %696 = vmatprep.subr.bf16.mxu0 0
        %697 = vmatpush1.bf16.msra.mxu0 %v675
        %698 = vmatprep.subr.bf16.mxu0 0
        %699 = vmatpush1.bf16.msra.mxu0 %v676
        %700 = vmatprep.subr.bf16.mxu0 0
        %701 = vmatpush1.bf16.msra.mxu0 %v677
        %702 = vmatprep.subr.bf16.mxu0 0
        %703 = vmatpush1.bf16.msra.mxu0 0
        %704 = vmatprep.subr.bf16.mxu0 0
        %705 = vmatpush1.bf16.msra.mxu0 0
        %706 = vmatprep.subr.bf16.mxu0 0
        %707 = vmatpush1.bf16.msra.mxu0 0
        %708 = vmatprep.subr.bf16.mxu0 0
        %709 = vmatpush1.bf16.msra.mxu0 0
        %710 = vmatprep.subr.bf16.mxu0 0
        %711 = vmatpush1.bf16.msra.mxu0 0
        %712 = vmatprep.subr.bf16.mxu0 0
        %713 = vmatpush1.bf16.msra.mxu0 0
        %714 = vmatprep.subr.bf16.mxu0 0
        %715 = vmatpush1.bf16.msra.mxu0 0
        %716 = vmatprep.subr.bf16.mxu0 0
        %717 = vmatpush1.bf16.msra.mxu0 0
        %718 = vmatprep.mubr.bf16.mxu0 0
        %719 = vmatmul.mubr.bf16.gmra.mrb[0].mxu0 %v518
        %v720 = vpop.f32.mrb[0].mxu0
        %v721 = vadd.f32 %v631, %v720
        %v722 = vpop.f32.mrb[0].mxu0
        %v723 = vpop.f32.mrb[0].mxu0
        %v724 = vadd.f32 %v634, %v723
        %v725 = vpop.f32.mrb[0].mxu0
        %726 = vdwg.mxu0
        %v727 = vrot.slane %v518, 1
        %vm728 = vcmask 1046528
        %v731 = vsel %vm728, %v727, 0
        %s733 = scalar_lea.vmem [#allocation4], 128
        %v734 = vld [vmem:[%s733] sm:$0xf]
        %v735 = vld [vmem:[%s733 + $0x4] sm:$0xf]
        %v736 = vld [vmem:[%s733 + $0x8] sm:$0xf]
        %v737 = vld [vmem:[%s733 + $0xc] sm:$0xf]
        %v738 = vld [vmem:[%s733 + $0x10] sm:$0xf]
        %v739 = vld [vmem:[%s733 + $0x14] sm:$0xf]
        %v740 = vld [vmem:[%s733 + $0x18] sm:$0xf]
        %v741 = vld [vmem:[%s733 + $0x1c] sm:$0xf]
        %v742 = vld [vmem:[%s733 + $0x20] sm:$0xf]
        %v743 = vld [vmem:[%s733 + $0x24] sm:$0xf]
        %v744 = vld [vmem:[%s733 + $0x28] sm:$0xf]
        %v745 = vld [vmem:[%s733 + $0x2c] sm:$0xf]
        %v746 = vld [vmem:[%s733 + $0x30] sm:$0xf]
        %v747 = vld [vmem:[%s733 + $0x34] sm:$0xf]
        %v748 = vld [vmem:[%s733 + $0x38] sm:$0xf]
        %v749 = vld [vmem:[%s733 + $0x3c] sm:$0xf]
        %v766 = vunpack.c.l.b16 %v734
        %v767 = vunpack.c.l.b16 %v735
        %v768 = vunpack.c.l.b16 %v736
        %v769 = vunpack.c.l.b16 %v737
        %v770 = vunpack.c.l.b16 %v738
        %v771 = vunpack.c.l.b16 %v739
        %v772 = vunpack.c.l.b16 %v740
        %v773 = vunpack.c.l.b16 %v741
        %v774 = vunpack.c.l.b16 %v742
        %v775 = vunpack.c.l.b16 %v743
        %v776 = vunpack.c.l.b16 %v744
        %v777 = vunpack.c.l.b16 %v745
        %v778 = vunpack.c.l.b16 %v746
        %v779 = vunpack.c.l.b16 %v747
        %v780 = vunpack.c.l.b16 %v748
        %v781 = vunpack.c.l.b16 %v749
        %v782 = vpack.c.b16 %v767, %v766
        %v783 = vpack.c.b16 %v769, %v768
        %v784 = vpack.c.b16 %v771, %v770
        %v785 = vpack.c.b16 %v773, %v772
        %v786 = vpack.c.b16 %v775, %v774
        %v787 = vpack.c.b16 %v777, %v776
        %v788 = vpack.c.b16 %v779, %v778
        %v789 = vpack.c.b16 %v781, %v780
        %798 = vmatprep.subr.bf16.mxu0 0
        %799 = vmatpush1.bf16.msra.mxu0 %v782
        %800 = vmatprep.subr.bf16.mxu0 0
        %801 = vmatpush1.bf16.msra.mxu0 %v783
        %802 = vmatprep.subr.bf16.mxu0 0
        %803 = vmatpush1.bf16.msra.mxu0 %v784
        %804 = vmatprep.subr.bf16.mxu0 0
        %805 = vmatpush1.bf16.msra.mxu0 %v785
        %806 = vmatprep.subr.bf16.mxu0 0
        %807 = vmatpush1.bf16.msra.mxu0 %v786
        %808 = vmatprep.subr.bf16.mxu0 0
        %809 = vmatpush1.bf16.msra.mxu0 %v787
        %810 = vmatprep.subr.bf16.mxu0 0
        %811 = vmatpush1.bf16.msra.mxu0 %v788
        %812 = vmatprep.subr.bf16.mxu0 0
        %813 = vmatpush1.bf16.msra.mxu0 %v789
        %814 = vmatprep.subr.bf16.mxu0 0
        %815 = vmatpush1.bf16.msra.mxu0 0
        %816 = vmatprep.subr.bf16.mxu0 0
        %817 = vmatpush1.bf16.msra.mxu0 0
        %818 = vmatprep.subr.bf16.mxu0 0
        %819 = vmatpush1.bf16.msra.mxu0 0
        %820 = vmatprep.subr.bf16.mxu0 0
        %821 = vmatpush1.bf16.msra.mxu0 0
        %822 = vmatprep.subr.bf16.mxu0 0
        %823 = vmatpush1.bf16.msra.mxu0 0
        %824 = vmatprep.subr.bf16.mxu0 0
        %825 = vmatpush1.bf16.msra.mxu0 0
        %826 = vmatprep.subr.bf16.mxu0 0
        %827 = vmatpush1.bf16.msra.mxu0 0
        %828 = vmatprep.subr.bf16.mxu0 0
        %829 = vmatpush1.bf16.msra.mxu0 0
        %830 = vmatprep.mubr.bf16.mxu0 0
        %831 = vmatmul.mubr.bf16.gmra.mrb[0].mxu0 %v731
        %v832 = vpop.f32.mrb[0].mxu0
        %v833 = vadd.f32 0.0, %v832
        %v834 = vpop.f32.mrb[0].mxu0
        %v835 = vpop.f32.mrb[0].mxu0
        %v836 = vadd.f32 0.0, %v835
        %v837 = vpop.f32.mrb[0].mxu0
        %838 = vdwg.mxu0
        %v839 = vadd.f32 %v721, %v833
        %v840 = vadd.f32 %v724, %v836
        %v842 = vlaneseq
        %v843 = vshrl.u32 %v842, 7
        %v844 = vsub.s32 0, %v843
        %v845 = vrot.slane %v497, %v844
        %v847 = vadd.f32 %v839, %v845
        %v848 = vadd.f32 %v840, %v845
        %vm849 = vcmp.ge.f32.partialorder %v847, 0.0
        %vm850 = vcmp.ge.f32.partialorder %v848, 0.0
        %v851 = vmul.f32 %v847, 0.1
        %v852 = vmul.f32 %v848, 0.1
        %v853 = vsel %vm849, %v847, %v851
        %v854 = vsel %vm850, %v848, %v852
        %v855 = vpack.c.bf16 %v854, %v853
        %v856 = vld [vmem:[%s4] sm:$0x1]
        %v857 = vld [vmem:[#allocation6] sm:$0xf]
        %v858 = vld [vmem:[#allocation6 + $0x4] sm:$0xf]
        %v859 = vld [vmem:[#allocation6 + $0x8] sm:$0xf]
        %v860 = vld [vmem:[#allocation6 + $0xc] sm:$0xf]
        %v861 = vld [vmem:[#allocation6 + $0x10] sm:$0xf]
        %v862 = vld [vmem:[#allocation6 + $0x14] sm:$0xf]
        %v863 = vld [vmem:[#allocation6 + $0x18] sm:$0xf]
        %v864 = vld [vmem:[#allocation6 + $0x1c] sm:$0xf]
        %v865 = vld [vmem:[#allocation6 + $0x20] sm:$0xf]
        %v866 = vld [vmem:[#allocation6 + $0x24] sm:$0xf]
        %v867 = vld [vmem:[#allocation6 + $0x28] sm:$0xf]
        %v868 = vld [vmem:[#allocation6 + $0x2c] sm:$0xf]
        %v869 = vld [vmem:[#allocation6 + $0x30] sm:$0xf]
        %v870 = vld [vmem:[#allocation6 + $0x34] sm:$0xf]
        %v871 = vld [vmem:[#allocation6 + $0x38] sm:$0xf]
        %v872 = vld [vmem:[#allocation6 + $0x3c] sm:$0xf]
        %v874 = vshrl.u32 %v855, 16
        %v876 = vshll.u32 %v855, 16
        %v878 = vrot.slane %v876, 1
        %v879 = vor.u32 %v874, %v878
        %v881 = vsel %vm529, %v879, 0
        %s882 = scalar_lea.vmem [#allocation6], 64
        %v883 = vld [vmem:[%s882] sm:$0xf]
        %v884 = vld [vmem:[%s882 + $0x4] sm:$0xf]
        %v885 = vld [vmem:[%s882 + $0x8] sm:$0xf]
        %v886 = vld [vmem:[%s882 + $0xc] sm:$0xf]
        %v887 = vld [vmem:[%s882 + $0x10] sm:$0xf]
        %v888 = vld [vmem:[%s882 + $0x14] sm:$0xf]
        %v889 = vld [vmem:[%s882 + $0x18] sm:$0xf]
        %v890 = vld [vmem:[%s882 + $0x1c] sm:$0xf]
        %v891 = vld [vmem:[%s882 + $0x20] sm:$0xf]
        %v892 = vld [vmem:[%s882 + $0x24] sm:$0xf]
        %v893 = vld [vmem:[%s882 + $0x28] sm:$0xf]
        %v894 = vld [vmem:[%s882 + $0x2c] sm:$0xf]
        %v895 = vld [vmem:[%s882 + $0x30] sm:$0xf]
        %v896 = vld [vmem:[%s882 + $0x34] sm:$0xf]
        %v897 = vld [vmem:[%s882 + $0x38] sm:$0xf]
        %v898 = vld [vmem:[%s882 + $0x3c] sm:$0xf]
        %v915 = vunpack.c.l.b16 %v883
        %v916 = vunpack.c.l.b16 %v884
        %v917 = vunpack.c.l.b16 %v885
        %v918 = vunpack.c.l.b16 %v886
        %v919 = vunpack.c.l.b16 %v887
        %v920 = vunpack.c.l.b16 %v888
        %v921 = vunpack.c.l.b16 %v889
        %v922 = vunpack.c.l.b16 %v890
        %v923 = vunpack.c.l.b16 %v891
        %v924 = vunpack.c.l.b16 %v892
        %v925 = vunpack.c.l.b16 %v893
        %v926 = vunpack.c.l.b16 %v894
        %v927 = vunpack.c.l.b16 %v895
        %v928 = vunpack.c.l.b16 %v896
        %v929 = vunpack.c.l.b16 %v897
        %v930 = vunpack.c.l.b16 %v898
        %v931 = vpack.c.b16 %v916, %v915
        %v932 = vpack.c.b16 %v918, %v917
        %v933 = vpack.c.b16 %v920, %v919
        %v934 = vpack.c.b16 %v922, %v921
        %v935 = vpack.c.b16 %v924, %v923
        %v936 = vpack.c.b16 %v926, %v925
        %v937 = vpack.c.b16 %v928, %v927
        %v938 = vpack.c.b16 %v930, %v929
        %947 = vmatprep.subr.bf16.mxu0 0
        %948 = vmatpush1.bf16.msra.mxu0 %v931
        %949 = vmatprep.subr.bf16.mxu0 0
        %950 = vmatpush1.bf16.msra.mxu0 %v932
        %951 = vmatprep.subr.bf16.mxu0 0
        %952 = vmatpush1.bf16.msra.mxu0 %v933
        %953 = vmatprep.subr.bf16.mxu0 0
        %954 = vmatpush1.bf16.msra.mxu0 %v934
        %955 = vmatprep.subr.bf16.mxu0 0
        %956 = vmatpush1.bf16.msra.mxu0 %v935
        %957 = vmatprep.subr.bf16.mxu0 0
        %958 = vmatpush1.bf16.msra.mxu0 %v936
        %959 = vmatprep.subr.bf16.mxu0 0
        %960 = vmatpush1.bf16.msra.mxu0 %v937
        %961 = vmatprep.subr.bf16.mxu0 0
        %962 = vmatpush1.bf16.msra.mxu0 %v938
        %963 = vmatprep.subr.bf16.mxu0 0
        %964 = vmatpush1.bf16.msra.mxu0 0
        %965 = vmatprep.subr.bf16.mxu0 0
        %966 = vmatpush1.bf16.msra.mxu0 0
        %967 = vmatprep.subr.bf16.mxu0 0
        %968 = vmatpush1.bf16.msra.mxu0 0
        %969 = vmatprep.subr.bf16.mxu0 0
        %970 = vmatpush1.bf16.msra.mxu0 0
        %971 = vmatprep.subr.bf16.mxu0 0
        %972 = vmatpush1.bf16.msra.mxu0 0
        %973 = vmatprep.subr.bf16.mxu0 0
        %974 = vmatpush1.bf16.msra.mxu0 0
        %975 = vmatprep.subr.bf16.mxu0 0
        %976 = vmatpush1.bf16.msra.mxu0 0
        %977 = vmatprep.subr.bf16.mxu0 0
        %978 = vmatpush1.bf16.msra.mxu0 0
        %979 = vmatprep.mubr.bf16.mxu0 0
        %980 = vmatmul.mubr.bf16.gmra.mrb[0].mxu0 %v881
        %v981 = vpop.f32.mrb[0].mxu0
        %v982 = vadd.f32 0.0, %v981
        %v983 = vpop.f32.mrb[0].mxu0
        %v984 = vpop.f32.mrb[0].mxu0
        %v985 = vadd.f32 0.0, %v984
        %v986 = vpop.f32.mrb[0].mxu0
        %987 = vdwg.mxu0
        %v1004 = vunpack.c.l.b16 %v857
        %v1005 = vunpack.c.l.b16 %v858
        %v1006 = vunpack.c.l.b16 %v859
        %v1007 = vunpack.c.l.b16 %v860
        %v1008 = vunpack.c.l.b16 %v861
        %v1009 = vunpack.c.l.b16 %v862
        %v1010 = vunpack.c.l.b16 %v863
        %v1011 = vunpack.c.l.b16 %v864
        %v1012 = vunpack.c.l.b16 %v865
        %v1013 = vunpack.c.l.b16 %v866
        %v1014 = vunpack.c.l.b16 %v867
        %v1015 = vunpack.c.l.b16 %v868
        %v1016 = vunpack.c.l.b16 %v869
        %v1017 = vunpack.c.l.b16 %v870
        %v1018 = vunpack.c.l.b16 %v871
        %v1019 = vunpack.c.l.b16 %v872
        %v1020 = vpack.c.b16 %v1005, %v1004
        %v1021 = vpack.c.b16 %v1007, %v1006
        %v1022 = vpack.c.b16 %v1009, %v1008
        %v1023 = vpack.c.b16 %v1011, %v1010
        %v1024 = vpack.c.b16 %v1013, %v1012
        %v1025 = vpack.c.b16 %v1015, %v1014
        %v1026 = vpack.c.b16 %v1017, %v1016
        %v1027 = vpack.c.b16 %v1019, %v1018
        %1036 = vmatprep.subr.bf16.mxu0 0
        %1037 = vmatpush1.bf16.msra.mxu0 %v1020
        %1038 = vmatprep.subr.bf16.mxu0 0
        %1039 = vmatpush1.bf16.msra.mxu0 %v1021
        %1040 = vmatprep.subr.bf16.mxu0 0
        %1041 = vmatpush1.bf16.msra.mxu0 %v1022
        %1042 = vmatprep.subr.bf16.mxu0 0
        %1043 = vmatpush1.bf16.msra.mxu0 %v1023
        %1044 = vmatprep.subr.bf16.mxu0 0
        %1045 = vmatpush1.bf16.msra.mxu0 %v1024
        %1046 = vmatprep.subr.bf16.mxu0 0
        %1047 = vmatpush1.bf16.msra.mxu0 %v1025
        %1048 = vmatprep.subr.bf16.mxu0 0
        %1049 = vmatpush1.bf16.msra.mxu0 %v1026
        %1050 = vmatprep.subr.bf16.mxu0 0
        %1051 = vmatpush1.bf16.msra.mxu0 %v1027
        %1052 = vmatprep.subr.bf16.mxu0 0
        %1053 = vmatpush1.bf16.msra.mxu0 0
        %1054 = vmatprep.subr.bf16.mxu0 0
        %1055 = vmatpush1.bf16.msra.mxu0 0
        %1056 = vmatprep.subr.bf16.mxu0 0
        %1057 = vmatpush1.bf16.msra.mxu0 0
        %1058 = vmatprep.subr.bf16.mxu0 0
        %1059 = vmatpush1.bf16.msra.mxu0 0
        %1060 = vmatprep.subr.bf16.mxu0 0
        %1061 = vmatpush1.bf16.msra.mxu0 0
        %1062 = vmatprep.subr.bf16.mxu0 0
        %1063 = vmatpush1.bf16.msra.mxu0 0
        %1064 = vmatprep.subr.bf16.mxu0 0
        %1065 = vmatpush1.bf16.msra.mxu0 0
        %1066 = vmatprep.subr.bf16.mxu0 0
        %1067 = vmatpush1.bf16.msra.mxu0 0
        %1068 = vmatprep.mubr.bf16.mxu0 0
        %1069 = vmatmul.mubr.bf16.gmra.mrb[0].mxu0 %v855
        %v1070 = vpop.f32.mrb[0].mxu0
        %v1071 = vadd.f32 %v982, %v1070
        %v1072 = vpop.f32.mrb[0].mxu0
        %v1073 = vpop.f32.mrb[0].mxu0
        %v1074 = vadd.f32 %v985, %v1073
        %v1075 = vpop.f32.mrb[0].mxu0
        %1076 = vdwg.mxu0
        %v1078 = vrot.slane %v855, 1
        %v1080 = vsel %vm728, %v1078, 0
        %s1082 = scalar_lea.vmem [#allocation6], 128
        %v1083 = vld [vmem:[%s1082] sm:$0xf]
        %v1084 = vld [vmem:[%s1082 + $0x4] sm:$0xf]
        %v1085 = vld [vmem:[%s1082 + $0x8] sm:$0xf]
        %v1086 = vld [vmem:[%s1082 + $0xc] sm:$0xf]
        %v1087 = vld [vmem:[%s1082 + $0x10] sm:$0xf]
        %v1088 = vld [vmem:[%s1082 + $0x14] sm:$0xf]
        %v1089 = vld [vmem:[%s1082 + $0x18] sm:$0xf]
        %v1090 = vld [vmem:[%s1082 + $0x1c] sm:$0xf]
        %v1091 = vld [vmem:[%s1082 + $0x20] sm:$0xf]
        %v1092 = vld [vmem:[%s1082 + $0x24] sm:$0xf]
        %v1093 = vld [vmem:[%s1082 + $0x28] sm:$0xf]
        %v1094 = vld [vmem:[%s1082 + $0x2c] sm:$0xf]
        %v1095 = vld [vmem:[%s1082 + $0x30] sm:$0xf]
        %v1096 = vld [vmem:[%s1082 + $0x34] sm:$0xf]
        %v1097 = vld [vmem:[%s1082 + $0x38] sm:$0xf]
        %v1098 = vld [vmem:[%s1082 + $0x3c] sm:$0xf]
        %v1115 = vunpack.c.l.b16 %v1083
        %v1116 = vunpack.c.l.b16 %v1084
        %v1117 = vunpack.c.l.b16 %v1085
        %v1118 = vunpack.c.l.b16 %v1086
        %v1119 = vunpack.c.l.b16 %v1087
        %v1120 = vunpack.c.l.b16 %v1088
        %v1121 = vunpack.c.l.b16 %v1089
        %v1122 = vunpack.c.l.b16 %v1090
        %v1123 = vunpack.c.l.b16 %v1091
        %v1124 = vunpack.c.l.b16 %v1092
        %v1125 = vunpack.c.l.b16 %v1093
        %v1126 = vunpack.c.l.b16 %v1094
        %v1127 = vunpack.c.l.b16 %v1095
        %v1128 = vunpack.c.l.b16 %v1096
        %v1129 = vunpack.c.l.b16 %v1097
        %v1130 = vunpack.c.l.b16 %v1098
        %v1131 = vpack.c.b16 %v1116, %v1115
        %v1132 = vpack.c.b16 %v1118, %v1117
        %v1133 = vpack.c.b16 %v1120, %v1119
        %v1134 = vpack.c.b16 %v1122, %v1121
        %v1135 = vpack.c.b16 %v1124, %v1123
        %v1136 = vpack.c.b16 %v1126, %v1125
        %v1137 = vpack.c.b16 %v1128, %v1127
        %v1138 = vpack.c.b16 %v1130, %v1129
        %1147 = vmatprep.subr.bf16.mxu0 0
        %1148 = vmatpush1.bf16.msra.mxu0 %v1131
        %1149 = vmatprep.subr.bf16.mxu0 0
        %1150 = vmatpush1.bf16.msra.mxu0 %v1132
        %1151 = vmatprep.subr.bf16.mxu0 0
        %1152 = vmatpush1.bf16.msra.mxu0 %v1133
        %1153 = vmatprep.subr.bf16.mxu0 0
        %1154 = vmatpush1.bf16.msra.mxu0 %v1134
        %1155 = vmatprep.subr.bf16.mxu0 0
        %1156 = vmatpush1.bf16.msra.mxu0 %v1135
        %1157 = vmatprep.subr.bf16.mxu0 0
        %1158 = vmatpush1.bf16.msra.mxu0 %v1136
        %1159 = vmatprep.subr.bf16.mxu0 0
        %1160 = vmatpush1.bf16.msra.mxu0 %v1137
        %1161 = vmatprep.subr.bf16.mxu0 0
        %1162 = vmatpush1.bf16.msra.mxu0 %v1138
        %1163 = vmatprep.subr.bf16.mxu0 0
        %1164 = vmatpush1.bf16.msra.mxu0 0
        %1165 = vmatprep.subr.bf16.mxu0 0
        %1166 = vmatpush1.bf16.msra.mxu0 0
        %1167 = vmatprep.subr.bf16.mxu0 0
        %1168 = vmatpush1.bf16.msra.mxu0 0
        %1169 = vmatprep.subr.bf16.mxu0 0
        %1170 = vmatpush1.bf16.msra.mxu0 0
        %1171 = vmatprep.subr.bf16.mxu0 0
        %1172 = vmatpush1.bf16.msra.mxu0 0
        %1173 = vmatprep.subr.bf16.mxu0 0
        %1174 = vmatpush1.bf16.msra.mxu0 0
        %1175 = vmatprep.subr.bf16.mxu0 0
        %1176 = vmatpush1.bf16.msra.mxu0 0
        %1177 = vmatprep.subr.bf16.mxu0 0
        %1178 = vmatpush1.bf16.msra.mxu0 0
        %1179 = vmatprep.mubr.bf16.mxu0 0
        %1180 = vmatmul.mubr.bf16.gmra.mrb[0].mxu0 %v1080
        %v1181 = vpop.f32.mrb[0].mxu0
        %v1182 = vadd.f32 0.0, %v1181
        %v1183 = vpop.f32.mrb[0].mxu0
        %v1184 = vpop.f32.mrb[0].mxu0
        %v1185 = vadd.f32 0.0, %v1184
        %v1186 = vpop.f32.mrb[0].mxu0
        %1187 = vdwg.mxu0
        %v1188 = vadd.f32 %v1071, %v1182
        %v1189 = vadd.f32 %v1074, %v1185
        %v1191 = vlaneseq
        %v1192 = vshrl.u32 %v1191, 7
        %v1193 = vsub.s32 0, %v1192
        %v1194 = vrot.slane %v856, %v1193
        %v1196 = vadd.f32 %v1188, %v1194
        %v1197 = vadd.f32 %v1189, %v1194
        %vm1198 = vcmp.ge.f32.partialorder %v1196, 0.0
        %vm1199 = vcmp.ge.f32.partialorder %v1197, 0.0
        %v1200 = vmul.f32 %v1196, 0.1
        %v1201 = vmul.f32 %v1197, 0.1
        %v1202 = vsel %vm1198, %v1196, %v1200
        %v1203 = vsel %vm1199, %v1197, %v1201
        %vm1204 = vcmask 1043456
        %v1205 = vsel %vm1204, %v1203, 0.0
        %v1206 = vadd.f32 %v1202, %v1205
        %v1207 = vrot.slane %v1206, 4
        %v1208 = vadd.f32 %v1206, %v1207
        %v1209 = vrot.slane %v1208, 2
        %v1210 = vadd.f32 %v1208, %v1209
        %v1211 = vrot.slane %v1210, 1
        %v1212 = vadd.f32 %v1210, %v1211
        %v1213 = vld [vmem:[#allocation7] sm:$0xff]
        %v1214 = vld [vmem:[#allocation7 + $0x8] sm:$0xff]
        %v1215 = vld [vmem:[#allocation7 + $0x10] sm:$0xff]
        %v1216 = vld [vmem:[#allocation7 + $0x18] sm:$0xff]
        %v1217 = vld [vmem:[#allocation7 + $0x20] sm:$0xff]
        %v1218 = vld [vmem:[#allocation7 + $0x28] sm:$0xff]
        %v1219 = vld [vmem:[#allocation7 + $0x30] sm:$0xff]
        %v1220 = vld [vmem:[#allocation7 + $0x38] sm:$0xff]
        %v1221 = vld [vmem:[#allocation7 + $0x40] sm:$0xff]
        %v1222 = vld [vmem:[#allocation7 + $0x48] sm:$0xff]
        %v1223 = vld [vmem:[#allocation7 + $0x50] sm:$0xff]
        %v1224 = vld [vmem:[#allocation7 + $0x58] sm:$0xff]
        %v1225 = vld [vmem:[#allocation7 + $0x60] sm:$0xff]
        %v1226 = vld [vmem:[#allocation7 + $0x68] sm:$0xff]
        %v1227 = vld [vmem:[#allocation7 + $0x70] sm:$0xff]
        %v1228 = vld [vmem:[#allocation7 + $0x78] sm:$0xff]
        %1229 = vmatprep.subr.mxu0 0.0
        %1230 = vmatpush1.msra.mxu0 %v1213
        %1231 = vmatprep.subr.mxu0 0.0
        %1232 = vmatpush1.msra.mxu0 %v1214
        %1233 = vmatprep.subr.mxu0 0.0
        %1234 = vmatpush1.msra.mxu0 %v1215
        %1235 = vmatprep.subr.mxu0 0.0
        %1236 = vmatpush1.msra.mxu0 %v1216
        %1237 = vmatprep.subr.mxu0 0.0
        %1238 = vmatpush1.msra.mxu0 %v1217
        %1239 = vmatprep.subr.mxu0 0.0
        %1240 = vmatpush1.msra.mxu0 %v1218
        %1241 = vmatprep.subr.mxu0 0.0
        %1242 = vmatpush1.msra.mxu0 %v1219
        %1243 = vmatprep.subr.mxu0 0.0
        %1244 = vmatpush1.msra.mxu0 %v1220
        %1245 = vmatprep.subr.mxu0 0.0
        %1246 = vmatpush1.msra.mxu0 %v1221
        %1247 = vmatprep.subr.mxu0 0.0
        %1248 = vmatpush1.msra.mxu0 %v1222
        %1249 = vmatprep.subr.mxu0 0.0
        %1250 = vmatpush1.msra.mxu0 %v1223
        %1251 = vmatprep.subr.mxu0 0.0
        %1252 = vmatpush1.msra.mxu0 %v1224
        %1253 = vmatprep.subr.mxu0 0.0
        %1254 = vmatpush1.msra.mxu0 %v1225
        %1255 = vmatprep.subr.mxu0 0.0
        %1256 = vmatpush1.msra.mxu0 %v1226
        %1257 = vmatprep.subr.mxu0 0.0
        %1258 = vmatpush1.msra.mxu0 %v1227
        %1259 = vmatprep.subr.mxu0 0.0
        %1260 = vmatpush1.msra.mxu0 %v1228
        %1261 = vmatprep.subr.mxu0 0.0
        %1262 = vmatpush1.msra.mxu0 0.0
        %1263 = vmatprep.subr.mxu0 0.0
        %1264 = vmatpush1.msra.mxu0 0.0
        %1265 = vmatprep.subr.mxu0 0.0
        %1266 = vmatpush1.msra.mxu0 0.0
        %1267 = vmatprep.subr.mxu0 0.0
        %1268 = vmatpush1.msra.mxu0 0.0
        %1269 = vmatprep.subr.mxu0 0.0
        %1270 = vmatpush1.msra.mxu0 0.0
        %1271 = vmatprep.subr.mxu0 0.0
        %1272 = vmatpush1.msra.mxu0 0.0
        %1273 = vmatprep.subr.mxu0 0.0
        %1274 = vmatpush1.msra.mxu0 0.0
        %1275 = vmatprep.subr.mxu0 0.0
        %1276 = vmatpush1.msra.mxu0 0.0
        %1277 = vmatprep.subr.mxu0 0.0
        %1278 = vmatpush1.msra.mxu0 0.0
        %1279 = vmatprep.subr.mxu0 0.0
        %1280 = vmatpush1.msra.mxu0 0.0
        %1281 = vmatprep.subr.mxu0 0.0
        %1282 = vmatpush1.msra.mxu0 0.0
        %1283 = vmatprep.subr.mxu0 0.0
        %1284 = vmatpush1.msra.mxu0 0.0
        %1285 = vmatprep.subr.mxu0 0.0
        %1286 = vmatpush1.msra.mxu0 0.0
        %1287 = vmatprep.subr.mxu0 0.0
        %1288 = vmatpush1.msra.mxu0 0.0
        %1289 = vmatprep.subr.mxu0 0.0
        %1290 = vmatpush1.msra.mxu0 0.0
        %1291 = vmatprep.subr.mxu0 0.0
        %1292 = vmatpush1.msra.mxu0 0.0
        %1293 = vmatprep.mubr.f32.mxu0 0.0
        %1294 = vmatmul.mubr.f32.gmra.mrb[0].mxu0 %v1212
        %v1295 = vpop.f32.mrb[0].mxu0
        %v1296 = vadd.f32 0.0, %v1295
        %v1297 = vpop.f32.mrb[0].mxu0
        %1298 = vdwg.mxu0
        %v1299 = vld [vmem:[#allocation10] sm:$0xff]
        %v1300 = vld [vmem:[#allocation10 + $0x8] sm:$0xff]
        %v1301 = vld [vmem:[#allocation10 + $0x10] sm:$0xff]
        %v1302 = vld [vmem:[#allocation10 + $0x18] sm:$0xff]
        %v1303 = vld [vmem:[#allocation10 + $0x20] sm:$0xff]
        %v1304 = vld [vmem:[#allocation10 + $0x28] sm:$0xff]
        %v1305 = vld [vmem:[#allocation10 + $0x30] sm:$0xff]
        %v1306 = vld [vmem:[#allocation10 + $0x38] sm:$0xff]
        %v1307 = vld [vmem:[#allocation10 + $0x40] sm:$0xff]
        %v1308 = vld [vmem:[#allocation10 + $0x48] sm:$0xff]
        %v1309 = vld [vmem:[#allocation10 + $0x50] sm:$0xff]
        %v1310 = vld [vmem:[#allocation10 + $0x58] sm:$0xff]
        %v1311 = vld [vmem:[#allocation10 + $0x60] sm:$0xff]
        %v1312 = vld [vmem:[#allocation10 + $0x68] sm:$0xff]
        %v1313 = vld [vmem:[#allocation10 + $0x70] sm:$0xff]
        %v1314 = vld [vmem:[#allocation10 + $0x78] sm:$0xff]
        %v1315 = vld [vmem:[%s8] sm:$0x1]
        %1316 = vmatprep.subr.mxu0 0.0
        %1317 = vmatpush1.msra.mxu0 %v1299
        %1318 = vmatprep.subr.mxu0 0.0
        %1319 = vmatpush1.msra.mxu0 %v1300
        %1320 = vmatprep.subr.mxu0 0.0
        %1321 = vmatpush1.msra.mxu0 %v1301
        %1322 = vmatprep.subr.mxu0 0.0
        %1323 = vmatpush1.msra.mxu0 %v1302
        %1324 = vmatprep.subr.mxu0 0.0
        %1325 = vmatpush1.msra.mxu0 %v1303
        %1326 = vmatprep.subr.mxu0 0.0
        %1327 = vmatpush1.msra.mxu0 %v1304
        %1328 = vmatprep.subr.mxu0 0.0
        %1329 = vmatpush1.msra.mxu0 %v1305
        %1330 = vmatprep.subr.mxu0 0.0
        %1331 = vmatpush1.msra.mxu0 %v1306
        %1332 = vmatprep.subr.mxu0 0.0
        %1333 = vmatpush1.msra.mxu0 %v1307
        %1334 = vmatprep.subr.mxu0 0.0
        %1335 = vmatpush1.msra.mxu0 %v1308
        %1336 = vmatprep.subr.mxu0 0.0
        %1337 = vmatpush1.msra.mxu0 %v1309
        %1338 = vmatprep.subr.mxu0 0.0
        %1339 = vmatpush1.msra.mxu0 %v1310
        %1340 = vmatprep.subr.mxu0 0.0
        %1341 = vmatpush1.msra.mxu0 %v1311
        %1342 = vmatprep.subr.mxu0 0.0
        %1343 = vmatpush1.msra.mxu0 %v1312
        %1344 = vmatprep.subr.mxu0 0.0
        %1345 = vmatpush1.msra.mxu0 %v1313
        %1346 = vmatprep.subr.mxu0 0.0
        %1347 = vmatpush1.msra.mxu0 %v1314
        %1348 = vmatprep.subr.mxu0 0.0
        %1349 = vmatpush1.msra.mxu0 0.0
        %1350 = vmatprep.subr.mxu0 0.0
        %1351 = vmatpush1.msra.mxu0 0.0
        %1352 = vmatprep.subr.mxu0 0.0
        %1353 = vmatpush1.msra.mxu0 0.0
        %1354 = vmatprep.subr.mxu0 0.0
        %1355 = vmatpush1.msra.mxu0 0.0
        %1356 = vmatprep.subr.mxu0 0.0
        %1357 = vmatpush1.msra.mxu0 0.0
        %1358 = vmatprep.subr.mxu0 0.0
        %1359 = vmatpush1.msra.mxu0 0.0
        %1360 = vmatprep.subr.mxu0 0.0
        %1361 = vmatpush1.msra.mxu0 0.0
        %1362 = vmatprep.subr.mxu0 0.0
        %1363 = vmatpush1.msra.mxu0 0.0
        %1364 = vmatprep.subr.mxu0 0.0
        %1365 = vmatpush1.msra.mxu0 0.0
        %1366 = vmatprep.subr.mxu0 0.0
        %1367 = vmatpush1.msra.mxu0 0.0
        %1368 = vmatprep.subr.mxu0 0.0
        %1369 = vmatpush1.msra.mxu0 0.0
        %1370 = vmatprep.subr.mxu0 0.0
        %1371 = vmatpush1.msra.mxu0 0.0
        %1372 = vmatprep.subr.mxu0 0.0
        %1373 = vmatpush1.msra.mxu0 0.0
        %1374 = vmatprep.subr.mxu0 0.0
        %1375 = vmatpush1.msra.mxu0 0.0
        %1376 = vmatprep.subr.mxu0 0.0
        %1377 = vmatpush1.msra.mxu0 0.0
        %1378 = vmatprep.subr.mxu0 0.0
        %1379 = vmatpush1.msra.mxu0 0.0
        %1380 = vmatprep.mubr.f32.mxu0 0.0
        %1381 = vmatmul.mubr.f32.gmra.mrb[0].mxu0 %v1296
        %v1382 = vpop.f32.mrb[0].mxu0
        %v1383 = vadd.f32 %v1315, %v1382
        %v1384 = vpop.f32.mrb[0].mxu0
        %1385 = vdwg.mxu0
        %v1386 = vmax.f32 %v1383, 0.0
        %v1387 = vld [vmem:[#allocation12] sm:$0xff]
        %v1388 = vld [vmem:[#allocation12 + $0x8] sm:$0xff]
        %v1389 = vld [vmem:[#allocation12 + $0x10] sm:$0xff]
        %v1390 = vld [vmem:[#allocation12 + $0x18] sm:$0xff]
        %v1391 = vld [vmem:[#allocation12 + $0x20] sm:$0xff]
        %v1392 = vld [vmem:[#allocation12 + $0x28] sm:$0xff]
        %v1393 = vld [vmem:[#allocation12 + $0x30] sm:$0xff]
        %v1394 = vld [vmem:[#allocation12 + $0x38] sm:$0xff]
        %v1395 = vld [vmem:[#allocation12 + $0x40] sm:$0xff]
        %v1396 = vld [vmem:[#allocation12 + $0x48] sm:$0xff]
        %v1397 = vld [vmem:[#allocation12 + $0x50] sm:$0xff]
        %v1398 = vld [vmem:[#allocation12 + $0x58] sm:$0xff]
        %v1399 = vld [vmem:[#allocation12 + $0x60] sm:$0xff]
        %v1400 = vld [vmem:[#allocation12 + $0x68] sm:$0xff]
        %v1401 = vld [vmem:[#allocation12 + $0x70] sm:$0xff]
        %v1402 = vld [vmem:[#allocation12 + $0x78] sm:$0xff]
        %v1403 = vld [vmem:[%s10] sm:$0x1]
        %1404 = vmatprep.subr.mxu0 0.0
        %1405 = vmatpush1.msra.mxu0 %v1387
        %1406 = vmatprep.subr.mxu0 0.0
        %1407 = vmatpush1.msra.mxu0 %v1388
        %1408 = vmatprep.subr.mxu0 0.0
        %1409 = vmatpush1.msra.mxu0 %v1389
        %1410 = vmatprep.subr.mxu0 0.0
        %1411 = vmatpush1.msra.mxu0 %v1390
        %1412 = vmatprep.subr.mxu0 0.0
        %1413 = vmatpush1.msra.mxu0 %v1391
        %1414 = vmatprep.subr.mxu0 0.0
        %1415 = vmatpush1.msra.mxu0 %v1392
        %1416 = vmatprep.subr.mxu0 0.0
        %1417 = vmatpush1.msra.mxu0 %v1393
        %1418 = vmatprep.subr.mxu0 0.0
        %1419 = vmatpush1.msra.mxu0 %v1394
        %1420 = vmatprep.subr.mxu0 0.0
        %1421 = vmatpush1.msra.mxu0 %v1395
        %1422 = vmatprep.subr.mxu0 0.0
        %1423 = vmatpush1.msra.mxu0 %v1396
        %1424 = vmatprep.subr.mxu0 0.0
        %1425 = vmatpush1.msra.mxu0 %v1397
        %1426 = vmatprep.subr.mxu0 0.0
        %1427 = vmatpush1.msra.mxu0 %v1398
        %1428 = vmatprep.subr.mxu0 0.0
        %1429 = vmatpush1.msra.mxu0 %v1399
        %1430 = vmatprep.subr.mxu0 0.0
        %1431 = vmatpush1.msra.mxu0 %v1400
        %1432 = vmatprep.subr.mxu0 0.0
        %1433 = vmatpush1.msra.mxu0 %v1401
        %1434 = vmatprep.subr.mxu0 0.0
        %1435 = vmatpush1.msra.mxu0 %v1402
        %1436 = vmatprep.subr.mxu0 0.0
        %1437 = vmatpush1.msra.mxu0 0.0
        %1438 = vmatprep.subr.mxu0 0.0
        %1439 = vmatpush1.msra.mxu0 0.0
        %1440 = vmatprep.subr.mxu0 0.0
        %1441 = vmatpush1.msra.mxu0 0.0
        %1442 = vmatprep.subr.mxu0 0.0
        %1443 = vmatpush1.msra.mxu0 0.0
        %1444 = vmatprep.subr.mxu0 0.0
        %1445 = vmatpush1.msra.mxu0 0.0
        %1446 = vmatprep.subr.mxu0 0.0
        %1447 = vmatpush1.msra.mxu0 0.0
        %1448 = vmatprep.subr.mxu0 0.0
        %1449 = vmatpush1.msra.mxu0 0.0
        %1450 = vmatprep.subr.mxu0 0.0
        %1451 = vmatpush1.msra.mxu0 0.0
        %1452 = vmatprep.subr.mxu0 0.0
        %1453 = vmatpush1.msra.mxu0 0.0
        %1454 = vmatprep.subr.mxu0 0.0
        %1455 = vmatpush1.msra.mxu0 0.0
        %1456 = vmatprep.subr.mxu0 0.0
        %1457 = vmatpush1.msra.mxu0 0.0
        %1458 = vmatprep.subr.mxu0 0.0
        %1459 = vmatpush1.msra.mxu0 0.0
        %1460 = vmatprep.subr.mxu0 0.0
        %1461 = vmatpush1.msra.mxu0 0.0
        %1462 = vmatprep.subr.mxu0 0.0
        %1463 = vmatpush1.msra.mxu0 0.0
        %1464 = vmatprep.subr.mxu0 0.0
        %1465 = vmatpush1.msra.mxu0 0.0
        %1466 = vmatprep.subr.mxu0 0.0
        %1467 = vmatpush1.msra.mxu0 0.0
        %1468 = vmatprep.mubr.f32.mxu0 0.0
        %1469 = vmatmul.mubr.f32.gmra.mrb[0].mxu0 %v1386
        %v1470 = vpop.f32.mrb[0].mxu0
        %v1471 = vadd.f32 %v1403, %v1470
        %v1472 = vpop.f32.mrb[0].mxu0
        %1473 = vdwg.mxu0
        %v1474 = vsub.f32 0.0, %v1471
        %v1475 = vmul.f32 %v1474, 1.442695
        %v1476 = vpow.pop %v1475
        %v1477 = vadd.f32 %v1476, 1.0
        %v1478 = vrcp.pop %v1477
        %v1479 = vld [vmem:[#allocation9] sm:$0xff]
        %v1480 = vld [vmem:[#allocation9 + $0x8] sm:$0xff]
        %v1481 = vld [vmem:[#allocation9 + $0x10] sm:$0xff]
        %v1482 = vld [vmem:[#allocation9 + $0x18] sm:$0xff]
        %v1483 = vld [vmem:[#allocation9 + $0x20] sm:$0xff]
        %v1484 = vld [vmem:[#allocation9 + $0x28] sm:$0xff]
        %v1485 = vld [vmem:[#allocation9 + $0x30] sm:$0xff]
        %v1486 = vld [vmem:[#allocation9 + $0x38] sm:$0xff]
        %v1487 = vld [vmem:[#allocation9 + $0x40] sm:$0xff]
        %v1488 = vld [vmem:[#allocation9 + $0x48] sm:$0xff]
        %v1489 = vld [vmem:[#allocation9 + $0x50] sm:$0xff]
        %v1490 = vld [vmem:[#allocation9 + $0x58] sm:$0xff]
        %v1491 = vld [vmem:[#allocation9 + $0x60] sm:$0xff]
        %v1492 = vld [vmem:[#allocation9 + $0x68] sm:$0xff]
        %v1493 = vld [vmem:[#allocation9 + $0x70] sm:$0xff]
        %v1494 = vld [vmem:[#allocation9 + $0x78] sm:$0xff]
        %1495 = vmatprep.subr.mxu0 0.0
        %1496 = vmatpush1.msra.mxu0 %v1479
        %1497 = vmatprep.subr.mxu0 0.0
        %1498 = vmatpush1.msra.mxu0 %v1480
        %1499 = vmatprep.subr.mxu0 0.0
        %1500 = vmatpush1.msra.mxu0 %v1481
        %1501 = vmatprep.subr.mxu0 0.0
        %1502 = vmatpush1.msra.mxu0 %v1482
        %1503 = vmatprep.subr.mxu0 0.0
        %1504 = vmatpush1.msra.mxu0 %v1483
        %1505 = vmatprep.subr.mxu0 0.0
        %1506 = vmatpush1.msra.mxu0 %v1484
        %1507 = vmatprep.subr.mxu0 0.0
        %1508 = vmatpush1.msra.mxu0 %v1485
        %1509 = vmatprep.subr.mxu0 0.0
        %1510 = vmatpush1.msra.mxu0 %v1486
        %1511 = vmatprep.subr.mxu0 0.0
        %1512 = vmatpush1.msra.mxu0 %v1487
        %1513 = vmatprep.subr.mxu0 0.0
        %1514 = vmatpush1.msra.mxu0 %v1488
        %1515 = vmatprep.subr.mxu0 0.0
        %1516 = vmatpush1.msra.mxu0 %v1489
        %1517 = vmatprep.subr.mxu0 0.0
        %1518 = vmatpush1.msra.mxu0 %v1490
        %1519 = vmatprep.subr.mxu0 0.0
        %1520 = vmatpush1.msra.mxu0 %v1491
        %1521 = vmatprep.subr.mxu0 0.0
        %1522 = vmatpush1.msra.mxu0 %v1492
        %1523 = vmatprep.subr.mxu0 0.0
        %1524 = vmatpush1.msra.mxu0 %v1493
        %1525 = vmatprep.subr.mxu0 0.0
        %1526 = vmatpush1.msra.mxu0 %v1494
        %1527 = vmatprep.subr.mxu0 0.0
        %1528 = vmatpush1.msra.mxu0 0.0
        %1529 = vmatprep.subr.mxu0 0.0
        %1530 = vmatpush1.msra.mxu0 0.0
        %1531 = vmatprep.subr.mxu0 0.0
        %1532 = vmatpush1.msra.mxu0 0.0
        %1533 = vmatprep.subr.mxu0 0.0
        %1534 = vmatpush1.msra.mxu0 0.0
        %1535 = vmatprep.subr.mxu0 0.0
        %1536 = vmatpush1.msra.mxu0 0.0
        %1537 = vmatprep.subr.mxu0 0.0
        %1538 = vmatpush1.msra.mxu0 0.0
        %1539 = vmatprep.subr.mxu0 0.0
        %1540 = vmatpush1.msra.mxu0 0.0
        %1541 = vmatprep.subr.mxu0 0.0
        %1542 = vmatpush1.msra.mxu0 0.0
        %1543 = vmatprep.subr.mxu0 0.0
        %1544 = vmatpush1.msra.mxu0 0.0
        %1545 = vmatprep.subr.mxu0 0.0
        %1546 = vmatpush1.msra.mxu0 0.0
        %1547 = vmatprep.subr.mxu0 0.0
        %1548 = vmatpush1.msra.mxu0 0.0
        %1549 = vmatprep.subr.mxu0 0.0
        %1550 = vmatpush1.msra.mxu0 0.0
        %1551 = vmatprep.subr.mxu0 0.0
        %1552 = vmatpush1.msra.mxu0 0.0
        %1553 = vmatprep.subr.mxu0 0.0
        %1554 = vmatpush1.msra.mxu0 0.0
        %1555 = vmatprep.subr.mxu0 0.0
        %1556 = vmatpush1.msra.mxu0 0.0
        %1557 = vmatprep.subr.mxu0 0.0
        %1558 = vmatpush1.msra.mxu0 0.0
        %1559 = vmatprep.mubr.f32.mxu0 0.0
        %1560 = vmatmul.mubr.f32.gmra.mrb[0].mxu0 %v1478
        %v1561 = vpop.f32.mrb[0].mxu0
        %v1562 = vadd.f32 0.0, %v1561
        %v1563 = vpop.f32.mrb[0].mxu0
        %1564 = vdwg.mxu0
        %v1565 = vlaneseq
        %v1566 = vshrl.u32 %v1565, 7
        %v1567 = vsub.s32 0, %v1566
        %v1568 = vrot.slane %v1562, %v1567
        %v1569 = vmul.f32 %v1202, %v1568
        %v1570 = vmul.f32 %v1203, %v1568
        %1571 = vst [vmem:[%s493] sm:$0xff] %v1569
        %1572 = vst [vmem:[%s493 + $0x8] sm:$0xf] %v1570
        %p1573 = scmp.lt.s32.totalorder %s28, 1
        %s1574 = scalar_select %p1573, %s28, 1
        %s1575 = smul.addr %s1574, 2
        %s1576 = smul.addr %s1575, 8
        %s1577 = scalar_lea.vmem %s11, %s1576
        // Predicated region
        $region93: #{tpu_custom_call.1} parent=63 // pred_check
          %p1578 = pneg %p282
        $region94: #{tpu_custom_call.1} parent=63 // pred_check_branch
          %1580 = sbr.rel (%p1578) target = $region96
        $region95: #{tpu_custom_call.1} parent=63 // pred_region
          _
        $region96: #{tpu_custom_call.1} parent=63 // pred_fallthru
          _
      $region64: #{tpu_custom_call.1} parent=5 // pred_fallthru
        _
      %p1581 = scmp.le.s32.totalorder 2, %s23
      // Predicated region
      $region97: #{tpu_custom_call.1} parent=5 // pred_check
        %p1582 = pneg %p1581
      $region98: #{tpu_custom_call.1} parent=5 // pred_check_branch
        %1584 = sbr.rel (%p1582) target = $region100
      $region99: #{tpu_custom_call.1} parent=5 // pred_region
        %s1585 = ssub.s32 %s23, 2
        // Predicated region
        $region101: #{tpu_custom_call.1} parent=99 // pred_check
          %p1586 = pneg %p288
        $region102: #{tpu_custom_call.1} parent=99 // pred_check_branch
          %1588 = sbr.rel (%p1586) target = $region104
        $region103: #{tpu_custom_call.1} parent=99 // pred_region
          %p1589 = scmp.lt.s32.totalorder %s29, 1
          %s1590 = scalar_select %p1589, %s29, 1
          %s1591 = smul.addr %s1590, 2
          %s1592 = smul.addr %s1591, 8
          %s1593 = scalar_lea.vmem %s11, %s1592
        $region104: #{tpu_custom_call.1} parent=99 // pred_fallthru
          _
      $region100: #{tpu_custom_call.1} parent=5 // pred_fallthru
        _
    $region6: #{tpu_custom_call.1} parent=1 // loop_footer
      %s27 = sadd.s32 1, %s23
    $region7: #{tpu_custom_call.1} parent=1 // loop_footer_branch
      %22 = sbr.rel target = $region3
    $region8: #{tpu_custom_call.1} parent=1 // loop_exit
      _
    %1594 = vsyncpa [#allocation3], 1
    %s1595 = scalar_lea.sflag [#allocation3], 1
    %1596 = vsyncpa %s1595, 1
    %1597 = vsyncpa [#allocation5], 1
    %1598 = vsyncpa [#allocation8], 1
    %1599 = vsyncpa [#allocation11], 1

</llo_original>
